<compile_context>
chip_gen: v7x
topology: tpu7x:2x2x1
jax: 0.10.0
libtpu: 0.0.40
codegen_flags: <defaults>
</compile_context>

<pallas_src>
import math

import jax
import jax.numpy as jnp
from jax import lax
from jax.experimental import pallas as pl
from jax.experimental.pallas import tpu as pltpu

INPUT_SIZE = 16
HIDDEN_SIZE = 50
HIDDEN_PADDED = 128          # pad H to one full 128-lane tile


def _lstm_kernel(x_ref, wx_ref, wh_ref, b_ref, out_ref, xz_ref):
    """Single-invocation LSTM over all timesteps.

    x_ref  : (B, T, I)       batch-first input, fully VMEM resident
    wx_ref : (I, 4*HP)       fused input->gates weights, packed gate order [i, f, o, g]
    wh_ref : (HP, 4*HP)      fused hidden->gates weights
    b_ref  : (1, 4*HP)       fused bias (b_ih + b_hh), f32
    out_ref: (B, HP)         last hidden state (padded)
    xz_ref : (T, B, 4*HP)    VMEM scratch: precomputed input projection, time-major
    """
    B, T, I = x_ref.shape
    HP = wh_ref.shape[0]
    mxu_dtype = wh_ref.dtype          # f32, or bf16 on bf16-native MXUs

    # ---- Hoisted input projection: one matmul per batch row, outside the serial
    # recurrence.  (B is small & static; per-batch stores also give the time-major
    # scratch layout without any transpose op.)
    wx = wx_ref[...]                  # (I, 4*HP) — small, used only here
    bias = b_ref[...]                 # (1, 4*HP)
    for bi in range(B):
        xb = x_ref[bi].astype(mxu_dtype)                     # (T, I)
        xz_ref[:, bi, :] = (
            jnp.dot(xb, wx, preferred_element_type=jnp.float32) + bias)

    # ---- Serial recurrence: one (B,HP)x(HP,4*HP) matmul + elementwise per step. ----
    def step(t, carry):
        h, c = carry                                         # (B, HP) f32 each
        # NOTE: do NOT hoist wh_ref[...] above the loop — 128x512 f32 = 256 KB is
        # the entire vreg file; let the matmul source its RHS from VMEM.
        z = xz_ref[t] + jnp.dot(h.astype(mxu_dtype), wh_ref[...],
                                preferred_element_type=jnp.float32)   # (B, 4*HP)

        # Packed gate order [i, f, o, g]: one wide sigmoid + one tanh per step.
        s = jax.nn.sigmoid(z[:, :3 * HP])
        i_g = s[:, 0 * HP:1 * HP]
        f_g = s[:, 1 * HP:2 * HP]
        o_g = s[:, 2 * HP:3 * HP]
        g_g = jnp.tanh(z[:, 3 * HP:])

        c_new = f_g * c + i_g * g_g
        h_new = o_g * jnp.tanh(c_new)
        return (h_new, c_new)

    # Zero initial state is REQUIRED for the padded-lane invariant: with zero padded
    # weights/bias, sigmoid(0)=0.5 but c_pad=0 and g_pad=tanh(0)=0, so h_pad/c_pad
    # stay exactly 0 through the whole recurrence.
    h0 = jnp.zeros((B, HP), jnp.float32)
    c0 = jnp.zeros((B, HP), jnp.float32)
    unroll = True if T <= 16 else 8   # full unroll only for short sequences
    h_last, _ = lax.fori_loop(0, T, step, (h0, c0), unroll=unroll)

    # Single unmasked, lane-dense store of the final hidden state.
    out_ref[...] = h_last.astype(out_ref.dtype)


def init_lstm_params(key, input_size=INPUT_SIZE, hidden_size=HIDDEN_SIZE):
    """Deterministic init mirroring nn.LSTM's uniform(-1/sqrt(H), 1/sqrt(H))."""
    bound = 1.0 / math.sqrt(hidden_size)
    k = jax.random.split(key, 4)
    # PyTorch weight_ih_l0: (4H, I), weight_hh_l0: (4H, H); gate order i, f, g, o.
    w_ih = jax.random.uniform(k[0], (4 * hidden_size, input_size),
                              minval=-bound, maxval=bound, dtype=jnp.float32)
    w_hh = jax.random.uniform(k[1], (4 * hidden_size, hidden_size),
                              minval=-bound, maxval=bound, dtype=jnp.float32)
    b_ih = jax.random.uniform(k[2], (4 * hidden_size,),
                              minval=-bound, maxval=bound, dtype=jnp.float32)
    b_hh = jax.random.uniform(k[3], (4 * hidden_size,),
                              minval=-bound, maxval=bound, dtype=jnp.float32)
    return {"w_ih": w_ih, "w_hh": w_hh, "b_ih": b_ih, "b_hh": b_hh}


# Pack as [i, f, o, g] so the three sigmoid gates are contiguous (one wide sigmoid).
_PACK_GATE_ORDER = (0, 1, 3, 2)   # indices into PyTorch's [i, f, g, o] layout


def _pack_params(params, hidden_size, hidden_padded, matmul_dtype):
    """Fuse the 4 gates, reorder to [i, f, o, g], zero-pad H -> HP.

    Returns:
      wx: (I, 4*HP)   wh: (HP, 4*HP)   b: (1, 4*HP) (bias always f32)
    Padded columns/rows are zero, which keeps the padded lanes of h and c exactly
    zero through the recurrence (given zero initial state).
    """
    H, HP = hidden_size, hidden_padded
    w_ih, w_hh = params["w_ih"], params["w_hh"]          # (4H, I), (4H, H)
    bias = params["b_ih"] + params["b_hh"]               # (4H,)

    wx_gates, wh_gates, b_gates = [], [], []
    for g in _PACK_GATE_ORDER:
        wxg = jnp.transpose(w_ih[g * H:(g + 1) * H, :])            # (I, H)
        whg = jnp.transpose(w_hh[g * H:(g + 1) * H, :])            # (H, H)
        bg = bias[g * H:(g + 1) * H].reshape(1, H)                 # (1, H)
        wx_gates.append(jnp.pad(wxg, ((0, 0), (0, HP - H))))       # (I, HP)
        wh_gates.append(jnp.pad(whg, ((0, HP - H), (0, HP - H))))  # (HP, HP)
        b_gates.append(jnp.pad(bg, ((0, 0), (0, HP - H))))         # (1, HP)

    wx = jnp.concatenate(wx_gates, axis=1).astype(matmul_dtype)    # (I, 4*HP)
    wh = jnp.concatenate(wh_gates, axis=1).astype(matmul_dtype)    # (HP, 4*HP)
    b = jnp.concatenate(b_gates, axis=1).astype(jnp.float32)       # (1, 4*HP)
    return wx, wh, b


def _select_matmul_dtype():
    """bf16 MXU operands on bf16-native generations (v6e / v7x); f32 elsewhere."""
    try:
        kind = jax.devices()[0].device_kind.lower()
    except Exception:
        return jnp.float32
    if any(tag in kind for tag in ("v6", "v7", "7x")):
        return jnp.bfloat16
    return jnp.float32


def emg_classifier_forward(x, params, *, matmul_dtype=jnp.float32):
    """x: (B, T, input_size) float32, batch_first like the PyTorch module.
    Returns (out_last, {}) where out_last: (B, hidden_size)."""
    B, T, I = x.shape
    H, HP = HIDDEN_SIZE, HIDDEN_PADDED
    assert I == INPUT_SIZE

    wx, wh, b = _pack_params(params, H, HP, matmul_dtype)
    x = x.astype(jnp.float32)

    vmem_full = pl.BlockSpec(memory_space=pltpu.MemorySpace.VMEM)

    # VMEM resident: x (BTI) + wx (32 KB) + wh (<=256 KB) + bias + xz scratch
    # (T*B*2 KB) + out — ~0.35 MB at these sizes; default scoped VMEM is plenty.
    out_padded = pl.pallas_call(
        _lstm_kernel,
        out_shape=jax.ShapeDtypeStruct((B, HP), jnp.float32),
        in_specs=[vmem_full, vmem_full, vmem_full, vmem_full],
        out_specs=vmem_full,
        scratch_shapes=[pltpu.VMEM((T, B, 4 * HP), jnp.float32)],
    )(x, wx, wh, b)

    return out_padded[:, :H], {}


def _lstm_ref(x, params):
    """Pure-JAX reference of the PyTorch LSTM forward for validation."""
    B, T, I = x.shape
    H = HIDDEN_SIZE
    w_ih, w_hh = params["w_ih"], params["w_hh"]
    b = params["b_ih"] + params["b_hh"]
    h = jnp.zeros((B, H), jnp.float32)
    c = jnp.zeros((B, H), jnp.float32)
    for t in range(T):
        z = x[:, t, :] @ w_ih.T + h @ w_hh.T + b
        i_g = jax.nn.sigmoid(z[:, 0 * H:1 * H])
        f_g = jax.nn.sigmoid(z[:, 1 * H:2 * H])
        g_g = jnp.tanh(z[:, 2 * H:3 * H])
        o_g = jax.nn.sigmoid(z[:, 3 * H:4 * H])
        c = f_g * c + i_g * g_g
        h = o_g * jnp.tanh(c)
    return h


if __name__ == "__main__":
    key = jax.random.PRNGKey(0)
    k_param, k_x = jax.random.split(key)

    B, T = 2, 8
    params = init_lstm_params(k_param)
    x = jax.random.normal(k_x, (B, T, INPUT_SIZE), dtype=jnp.float32)

    ref = _lstm_ref(x, params)

    # f32 matmul path: tight agreement with the f32 (PyTorch-equivalent) reference.
    fwd_f32 = jax.jit(lambda xx, pp: emg_classifier_forward(
        xx, pp, matmul_dtype=jnp.float32))
    out32, extras = fwd_f32(x, params)
    out32 = jax.block_until_ready(out32)
    assert out32.shape == (B, HIDDEN_SIZE)
    assert extras == {}
    assert jnp.allclose(out32, ref, atol=1e-5, rtol=1e-5), "f32 mismatch vs reference"

    # Generation-aware fast path: bf16 MXU operands on v6e / v7x (looser tolerance).
    md = _select_matmul_dtype()
    if md != jnp.float32:
        fwd_fast = jax.jit(lambda xx, pp: emg_classifier_forward(
            xx, pp, matmul_dtype=md))
        out_fast, _ = fwd_fast(x, params)
        out_fast = jax.block_until_ready(out_fast)
        assert out_fast.shape == (B, HIDDEN_SIZE)
        assert jnp.allclose(out_fast, ref, atol=5e-2, rtol=5e-2), \
            "bf16-operand mismatch vs reference"

    print("KERNEL_OK")
</pallas_src>

<mosaic_0001>
module attributes {stable_mosaic.version = 11 : i64} {
  func.func @_lstm_kernel(%arg0: memref<2x8x16xf32, #tpu.memory_space<vmem>>, %arg1: memref<16x512xf32, #tpu.memory_space<vmem>>, %arg2: memref<128x512xf32, #tpu.memory_space<vmem>>, %arg3: memref<1x512xf32, #tpu.memory_space<vmem>>, %arg4: memref<2x128xf32, #tpu.memory_space<vmem>>, %arg5: memref<8x2x512xf32, #tpu.memory_space<vmem>>) attributes {dimension_semantics = [], scalar_prefetch = 0 : i64, scratch_operands = 1 : i64, tpu.core_type = #tpu.core_type<tc>} {
    %c0 = arith.constant 0 : index
    %c0_0 = arith.constant 0 : index
    %0 = vector.load %arg1[%c0, %c0_0] : memref<16x512xf32, #tpu.memory_space<vmem>>, vector<16x512xf32>
    %c0_1 = arith.constant 0 : index
    %c0_2 = arith.constant 0 : index
    %1 = vector.load %arg3[%c0_1, %c0_2] : memref<1x512xf32, #tpu.memory_space<vmem>>, vector<1x512xf32>
    %c0_3 = arith.constant 0 : index
    %c0_4 = arith.constant 0 : index
    %c0_5 = arith.constant 0 : index
    %2 = vector.load %arg0[%c0_3, %c0_4, %c0_5] : memref<2x8x16xf32, #tpu.memory_space<vmem>>, vector<1x8x16xf32>
    %3 = vector.shape_cast %2 : vector<1x8x16xf32> to vector<8x16xf32>
    %cst = arith.constant dense<0.000000e+00> : vector<8x512xf32>
    %4 = tpu.matmul %3, %0, %cst {dimension_numbers = #tpu.dot_dimension_numbers<[1], [0], [0], [1], [0, 0, 1, 1], [], []>} : vector<8x16xf32>, vector<16x512xf32>, vector<8x512xf32> -> vector<8x512xf32>
    %5 = vector.broadcast %1 : vector<1x512xf32> to vector<8x512xf32>
    %6 = arith.addf %4, %5 : vector<8x512xf32>
    %c0_6 = arith.constant 0 : index
    %c0_7 = arith.constant 0 : index
    %c0_8 = arith.constant 0 : index
    %7 = vector.load %arg5[%c0_6, %c0_7, %c0_8] : memref<8x2x512xf32, #tpu.memory_space<vmem>>, vector<8x1x512xf32>
    %8 = vector.shape_cast %7 : vector<8x1x512xf32> to vector<8x512xf32>
    %9 = vector.shape_cast %6 : vector<8x512xf32> to vector<8x1x512xf32>
    tpu.vector_store %arg5[%c0_6, %c0_7, %c0_8], %9 {strides = array<i32>} : memref<8x2x512xf32, #tpu.memory_space<vmem>>, vector<8x1x512xf32>,
    %c1 = arith.constant 1 : index
    %c0_9 = arith.constant 0 : index
    %c0_10 = arith.constant 0 : index
    %10 = vector.load %arg0[%c1, %c0_9, %c0_10] : memref<2x8x16xf32, #tpu.memory_space<vmem>>, vector<1x8x16xf32>
    %11 = vector.shape_cast %10 : vector<1x8x16xf32> to vector<8x16xf32>
    %cst_11 = arith.constant dense<0.000000e+00> : vector<8x512xf32>
    %12 = tpu.matmul %11, %0, %cst_11 {dimension_numbers = #tpu.dot_dimension_numbers<[1], [0], [0], [1], [0, 0, 1, 1], [], []>} : vector<8x16xf32>, vector<16x512xf32>, vector<8x512xf32> -> vector<8x512xf32>
    %13 = vector.broadcast %1 : vector<1x512xf32> to vector<8x512xf32>
    %14 = arith.addf %12, %13 : vector<8x512xf32>
    %c0_12 = arith.constant 0 : index
    %c1_13 = arith.constant 1 : index
    %c0_14 = arith.constant 0 : index
    %15 = vector.load %arg5[%c0_12, %c1_13, %c0_14] : memref<8x2x512xf32, #tpu.memory_space<vmem>>, vector<8x1x512xf32>
    %16 = vector.shape_cast %15 : vector<8x1x512xf32> to vector<8x512xf32>
    %17 = vector.shape_cast %14 : vector<8x512xf32> to vector<8x1x512xf32>
    tpu.vector_store %arg5[%c0_12, %c1_13, %c0_14], %17 {strides = array<i32>} : memref<8x2x512xf32, #tpu.memory_space<vmem>>, vector<8x1x512xf32>,
    %cst_15 = arith.constant 0.000000e+00 : f32
    %18 = vector.broadcast %cst_15 : f32 to vector<2x128xf32>
    %cst_16 = arith.constant 0.000000e+00 : f32
    %19 = vector.broadcast %cst_16 : f32 to vector<2x128xf32>
    %c0_i32 = arith.constant 0 : i32
    %20 = arith.index_cast %c0_i32 : i32 to index
    %c0_17 = arith.constant 0 : index
    %c0_18 = arith.constant 0 : index
    %21 = vector.load %arg5[%20, %c0_17, %c0_18] : memref<8x2x512xf32, #tpu.memory_space<vmem>>, vector<1x2x512xf32>
    %22 = vector.shape_cast %21 : vector<1x2x512xf32> to vector<2x512xf32>
    %c0_19 = arith.constant 0 : index
    %c0_20 = arith.constant 0 : index
    %23 = vector.load %arg2[%c0_19, %c0_20] : memref<128x512xf32, #tpu.memory_space<vmem>>, vector<128x512xf32>
    %cst_21 = arith.constant dense<0.000000e+00> : vector<2x512xf32>
    %24 = tpu.matmul %18, %23, %cst_21 {dimension_numbers = #tpu.dot_dimension_numbers<[1], [0], [0], [1], [0, 0, 1, 1], [], []>} : vector<2x128xf32>, vector<128x512xf32>, vector<2x512xf32> -> vector<2x512xf32>
    %25 = arith.addf %22, %24 : vector<2x512xf32>
    %26 = vector.extract_strided_slice %25 {offsets = [0, 0], sizes = [2, 384], strides = [1, 1]} : vector<2x512xf32> to vector<2x384xf32>
    %27 = arith.negf %26 : vector<2x384xf32>
    %28 = math.exp %27 : vector<2x384xf32>
    %cst_22 = arith.constant 1.000000e+00 : f32
    %29 = vector.broadcast %cst_22 : f32 to vector<2x384xf32>
    %30 = arith.addf %29, %28 : vector<2x384xf32>
    %31 = arith.divf %29, %30 : vector<2x384xf32>
    %32 = vector.extract_strided_slice %31 {offsets = [0, 0], sizes = [2, 128], strides = [1, 1]} : vector<2x384xf32> to vector<2x128xf32>
    %33 = vector.extract_strided_slice %31 {offsets = [0, 128], sizes = [2, 128], strides = [1, 1]} : vector<2x384xf32> to vector<2x128xf32>
    %34 = vector.extract_strided_slice %31 {offsets = [0, 256], sizes = [2, 128], strides = [1, 1]} : vector<2x384xf32> to vector<2x128xf32>
    %35 = vector.extract_strided_slice %25 {offsets = [0, 384], sizes = [2, 128], strides = [1, 1]} : vector<2x512xf32> to vector<2x128xf32>
    %36 = math.tanh %35 : vector<2x128xf32>
    %37 = arith.mulf %33, %19 : vector<2x128xf32>
    %38 = arith.mulf %32, %36 : vector<2x128xf32>
    %39 = arith.addf %37, %38 : vector<2x128xf32>
    %40 = math.tanh %39 : vector<2x128xf32>
    %41 = arith.mulf %34, %40 : vector<2x128xf32>
    %c1_i32 = arith.constant 1 : i32
    %42 = arith.index_cast %c1_i32 : i32 to index
    %c0_23 = arith.constant 0 : index
    %c0_24 = arith.constant 0 : index
    %43 = vector.load %arg5[%42, %c0_23, %c0_24] : memref<8x2x512xf32, #tpu.memory_space<vmem>>, vector<1x2x512xf32>
    %44 = vector.shape_cast %43 : vector<1x2x512xf32> to vector<2x512xf32>
    %c0_25 = arith.constant 0 : index
    %c0_26 = arith.constant 0 : index
    %45 = vector.load %arg2[%c0_25, %c0_26] : memref<128x512xf32, #tpu.memory_space<vmem>>, vector<128x512xf32>
    %cst_27 = arith.constant dense<0.000000e+00> : vector<2x512xf32>
    %46 = tpu.matmul %41, %45, %cst_27 {dimension_numbers = #tpu.dot_dimension_numbers<[1], [0], [0], [1], [0, 0, 1, 1], [], []>} : vector<2x128xf32>, vector<128x512xf32>, vector<2x512xf32> -> vector<2x512xf32>
    %47 = arith.addf %44, %46 : vector<2x512xf32>
    %48 = vector.extract_strided_slice %47 {offsets = [0, 0], sizes = [2, 384], strides = [1, 1]} : vector<2x512xf32> to vector<2x384xf32>
    %49 = arith.negf %48 : vector<2x384xf32>
    %50 = math.exp %49 : vector<2x384xf32>
    %cst_28 = arith.constant 1.000000e+00 : f32
    %51 = vector.broadcast %cst_28 : f32 to vector<2x384xf32>
    %52 = arith.addf %51, %50 : vector<2x384xf32>
    %53 = arith.divf %51, %52 : vector<2x384xf32>
    %54 = vector.extract_strided_slice %53 {offsets = [0, 0], sizes = [2, 128], strides = [1, 1]} : vector<2x384xf32> to vector<2x128xf32>
    %55 = vector.extract_strided_slice %53 {offsets = [0, 128], sizes = [2, 128], strides = [1, 1]} : vector<2x384xf32> to vector<2x128xf32>
    %56 = vector.extract_strided_slice %53 {offsets = [0, 256], sizes = [2, 128], strides = [1, 1]} : vector<2x384xf32> to vector<2x128xf32>
    %57 = vector.extract_strided_slice %47 {offsets = [0, 384], sizes = [2, 128], strides = [1, 1]} : vector<2x512xf32> to vector<2x128xf32>
    %58 = math.tanh %57 : vector<2x128xf32>
    %59 = arith.mulf %55, %39 : vector<2x128xf32>
    %60 = arith.mulf %54, %58 : vector<2x128xf32>
    %61 = arith.addf %59, %60 : vector<2x128xf32>
    %62 = math.tanh %61 : vector<2x128xf32>
    %63 = arith.mulf %56, %62 : vector<2x128xf32>
    %c2_i32 = arith.constant 2 : i32
    %64 = arith.index_cast %c2_i32 : i32 to index
    %c0_29 = arith.constant 0 : index
    %c0_30 = arith.constant 0 : index
    %65 = vector.load %arg5[%64, %c0_29, %c0_30] : memref<8x2x512xf32, #tpu.memory_space<vmem>>, vector<1x2x512xf32>
    %66 = vector.shape_cast %65 : vector<1x2x512xf32> to vector<2x512xf32>
    %c0_31 = arith.constant 0 : index
    %c0_32 = arith.constant 0 : index
    %67 = vector.load %arg2[%c0_31, %c0_32] : memref<128x512xf32, #tpu.memory_space<vmem>>, vector<128x512xf32>
    %cst_33 = arith.constant dense<0.000000e+00> : vector<2x512xf32>
    %68 = tpu.matmul %63, %67, %cst_33 {dimension_numbers = #tpu.dot_dimension_numbers<[1], [0], [0], [1], [0, 0, 1, 1], [], []>} : vector<2x128xf32>, vector<128x512xf32>, vector<2x512xf32> -> vector<2x512xf32>
    %69 = arith.addf %66, %68 : vector<2x512xf32>
    %70 = vector.extract_strided_slice %69 {offsets = [0, 0], sizes = [2, 384], strides = [1, 1]} : vector<2x512xf32> to vector<2x384xf32>
    %71 = arith.negf %70 : vector<2x384xf32>
    %72 = math.exp %71 : vector<2x384xf32>
    %cst_34 = arith.constant 1.000000e+00 : f32
    %73 = vector.broadcast %cst_34 : f32 to vector<2x384xf32>
    %74 = arith.addf %73, %72 : vector<2x384xf32>
    %75 = arith.divf %73, %74 : vector<2x384xf32>
    %76 = vector.extract_strided_slice %75 {offsets = [0, 0], sizes = [2, 128], strides = [1, 1]} : vector<2x384xf32> to vector<2x128xf32>
    %77 = vector.extract_strided_slice %75 {offsets = [0, 128], sizes = [2, 128], strides = [1, 1]} : vector<2x384xf32> to vector<2x128xf32>
    %78 = vector.extract_strided_slice %75 {offsets = [0, 256], sizes = [2, 128], strides = [1, 1]} : vector<2x384xf32> to vector<2x128xf32>
    %79 = vector.extract_strided_slice %69 {offsets = [0, 384], sizes = [2, 128], strides = [1, 1]} : vector<2x512xf32> to vector<2x128xf32>
    %80 = math.tanh %79 : vector<2x128xf32>
    %81 = arith.mulf %77, %61 : vector<2x128xf32>
    %82 = arith.mulf %76, %80 : vector<2x128xf32>
    %83 = arith.addf %81, %82 : vector<2x128xf32>
    %84 = math.tanh %83 : vector<2x128xf32>
    %85 = arith.mulf %78, %84 : vector<2x128xf32>
    %c3_i32 = arith.constant 3 : i32
    %86 = arith.index_cast %c3_i32 : i32 to index
    %c0_35 = arith.constant 0 : index
    %c0_36 = arith.constant 0 : index
    %87 = vector.load %arg5[%86, %c0_35, %c0_36] : memref<8x2x512xf32, #tpu.memory_space<vmem>>, vector<1x2x512xf32>
    %88 = vector.shape_cast %87 : vector<1x2x512xf32> to vector<2x512xf32>
    %c0_37 = arith.constant 0 : index
    %c0_38 = arith.constant 0 : index
    %89 = vector.load %arg2[%c0_37, %c0_38] : memref<128x512xf32, #tpu.memory_space<vmem>>, vector<128x512xf32>
    %cst_39 = arith.constant dense<0.000000e+00> : vector<2x512xf32>
    %90 = tpu.matmul %85, %89, %cst_39 {dimension_numbers = #tpu.dot_dimension_numbers<[1], [0], [0], [1], [0, 0, 1, 1], [], []>} : vector<2x128xf32>, vector<128x512xf32>, vector<2x512xf32> -> vector<2x512xf32>
    %91 = arith.addf %88, %90 : vector<2x512xf32>
    %92 = vector.extract_strided_slice %91 {offsets = [0, 0], sizes = [2, 384], strides = [1, 1]} : vector<2x512xf32> to vector<2x384xf32>
    %93 = arith.negf %92 : vector<2x384xf32>
    %94 = math.exp %93 : vector<2x384xf32>
    %cst_40 = arith.constant 1.000000e+00 : f32
    %95 = vector.broadcast %cst_40 : f32 to vector<2x384xf32>
    %96 = arith.addf %95, %94 : vector<2x384xf32>
    %97 = arith.divf %95, %96 : vector<2x384xf32>
    %98 = vector.extract_strided_slice %97 {offsets = [0, 0], sizes = [2, 128], strides = [1, 1]} : vector<2x384xf32> to vector<2x128xf32>
    %99 = vector.extract_strided_slice %97 {offsets = [0, 128], sizes = [2, 128], strides = [1, 1]} : vector<2x384xf32> to vector<2x128xf32>
    %100 = vector.extract_strided_slice %97 {offsets = [0, 256], sizes = [2, 128], strides = [1, 1]} : vector<2x384xf32> to vector<2x128xf32>
    %101 = vector.extract_strided_slice %91 {offsets = [0, 384], sizes = [2, 128], strides = [1, 1]} : vector<2x512xf32> to vector<2x128xf32>
    %102 = math.tanh %101 : vector<2x128xf32>
    %103 = arith.mulf %99, %83 : vector<2x128xf32>
    %104 = arith.mulf %98, %102 : vector<2x128xf32>
    %105 = arith.addf %103, %104 : vector<2x128xf32>
    %106 = math.tanh %105 : vector<2x128xf32>
    %107 = arith.mulf %100, %106 : vector<2x128xf32>
    %c4_i32 = arith.constant 4 : i32
    %108 = arith.index_cast %c4_i32 : i32 to index
    %c0_41 = arith.constant 0 : index
    %c0_42 = arith.constant 0 : index
    %109 = vector.load %arg5[%108, %c0_41, %c0_42] : memref<8x2x512xf32, #tpu.memory_space<vmem>>, vector<1x2x512xf32>
    %110 = vector.shape_cast %109 : vector<1x2x512xf32> to vector<2x512xf32>
    %c0_43 = arith.constant 0 : index
    %c0_44 = arith.constant 0 : index
    %111 = vector.load %arg2[%c0_43, %c0_44] : memref<128x512xf32, #tpu.memory_space<vmem>>, vector<128x512xf32>
    %cst_45 = arith.constant dense<0.000000e+00> : vector<2x512xf32>
    %112 = tpu.matmul %107, %111, %cst_45 {dimension_numbers = #tpu.dot_dimension_numbers<[1], [0], [0], [1], [0, 0, 1, 1], [], []>} : vector<2x128xf32>, vector<128x512xf32>, vector<2x512xf32> -> vector<2x512xf32>
    %113 = arith.addf %110, %112 : vector<2x512xf32>
    %114 = vector.extract_strided_slice %113 {offsets = [0, 0], sizes = [2, 384], strides = [1, 1]} : vector<2x512xf32> to vector<2x384xf32>
    %115 = arith.negf %114 : vector<2x384xf32>
    %116 = math.exp %115 : vector<2x384xf32>
    %cst_46 = arith.constant 1.000000e+00 : f32
    %117 = vector.broadcast %cst_46 : f32 to vector<2x384xf32>
    %118 = arith.addf %117, %116 : vector<2x384xf32>
    %119 = arith.divf %117, %118 : vector<2x384xf32>
    %120 = vector.extract_strided_slice %119 {offsets = [0, 0], sizes = [2, 128], strides = [1, 1]} : vector<2x384xf32> to vector<2x128xf32>
    %121 = vector.extract_strided_slice %119 {offsets = [0, 128], sizes = [2, 128], strides = [1, 1]} : vector<2x384xf32> to vector<2x128xf32>
    %122 = vector.extract_strided_slice %119 {offsets = [0, 256], sizes = [2, 128], strides = [1, 1]} : vector<2x384xf32> to vector<2x128xf32>
    %123 = vector.extract_strided_slice %113 {offsets = [0, 384], sizes = [2, 128], strides = [1, 1]} : vector<2x512xf32> to vector<2x128xf32>
    %124 = math.tanh %123 : vector<2x128xf32>
    %125 = arith.mulf %121, %105 : vector<2x128xf32>
    %126 = arith.mulf %120, %124 : vector<2x128xf32>
    %127 = arith.addf %125, %126 : vector<2x128xf32>
    %128 = math.tanh %127 : vector<2x128xf32>
    %129 = arith.mulf %122, %128 : vector<2x128xf32>
    %c5_i32 = arith.constant 5 : i32
    %130 = arith.index_cast %c5_i32 : i32 to index
    %c0_47 = arith.constant 0 : index
    %c0_48 = arith.constant 0 : index
    %131 = vector.load %arg5[%130, %c0_47, %c0_48] : memref<8x2x512xf32, #tpu.memory_space<vmem>>, vector<1x2x512xf32>
    %132 = vector.shape_cast %131 : vector<1x2x512xf32> to vector<2x512xf32>
    %c0_49 = arith.constant 0 : index
    %c0_50 = arith.constant 0 : index
    %133 = vector.load %arg2[%c0_49, %c0_50] : memref<128x512xf32, #tpu.memory_space<vmem>>, vector<128x512xf32>
    %cst_51 = arith.constant dense<0.000000e+00> : vector<2x512xf32>
    %134 = tpu.matmul %129, %133, %cst_51 {dimension_numbers = #tpu.dot_dimension_numbers<[1], [0], [0], [1], [0, 0, 1, 1], [], []>} : vector<2x128xf32>, vector<128x512xf32>, vector<2x512xf32> -> vector<2x512xf32>
    %135 = arith.addf %132, %134 : vector<2x512xf32>
    %136 = vector.extract_strided_slice %135 {offsets = [0, 0], sizes = [2, 384], strides = [1, 1]} : vector<2x512xf32> to vector<2x384xf32>
    %137 = arith.negf %136 : vector<2x384xf32>
    %138 = math.exp %137 : vector<2x384xf32>
    %cst_52 = arith.constant 1.000000e+00 : f32
    %139 = vector.broadcast %cst_52 : f32 to vector<2x384xf32>
    %140 = arith.addf %139, %138 : vector<2x384xf32>
    %141 = arith.divf %139, %140 : vector<2x384xf32>
    %142 = vector.extract_strided_slice %141 {offsets = [0, 0], sizes = [2, 128], strides = [1, 1]} : vector<2x384xf32> to vector<2x128xf32>
    %143 = vector.extract_strided_slice %141 {offsets = [0, 128], sizes = [2, 128], strides = [1, 1]} : vector<2x384xf32> to vector<2x128xf32>
    %144 = vector.extract_strided_slice %141 {offsets = [0, 256], sizes = [2, 128], strides = [1, 1]} : vector<2x384xf32> to vector<2x128xf32>
    %145 = vector.extract_strided_slice %135 {offsets = [0, 384], sizes = [2, 128], strides = [1, 1]} : vector<2x512xf32> to vector<2x128xf32>
    %146 = math.tanh %145 : vector<2x128xf32>
    %147 = arith.mulf %143, %127 : vector<2x128xf32>
    %148 = arith.mulf %142, %146 : vector<2x128xf32>
    %149 = arith.addf %147, %148 : vector<2x128xf32>
    %150 = math.tanh %149 : vector<2x128xf32>
    %151 = arith.mulf %144, %150 : vector<2x128xf32>
    %c6_i32 = arith.constant 6 : i32
    %152 = arith.index_cast %c6_i32 : i32 to index
    %c0_53 = arith.constant 0 : index
    %c0_54 = arith.constant 0 : index
    %153 = vector.load %arg5[%152, %c0_53, %c0_54] : memref<8x2x512xf32, #tpu.memory_space<vmem>>, vector<1x2x512xf32>
    %154 = vector.shape_cast %153 : vector<1x2x512xf32> to vector<2x512xf32>
    %c0_55 = arith.constant 0 : index
    %c0_56 = arith.constant 0 : index
    %155 = vector.load %arg2[%c0_55, %c0_56] : memref<128x512xf32, #tpu.memory_space<vmem>>, vector<128x512xf32>
    %cst_57 = arith.constant dense<0.000000e+00> : vector<2x512xf32>
    %156 = tpu.matmul %151, %155, %cst_57 {dimension_numbers = #tpu.dot_dimension_numbers<[1], [0], [0], [1], [0, 0, 1, 1], [], []>} : vector<2x128xf32>, vector<128x512xf32>, vector<2x512xf32> -> vector<2x512xf32>
    %157 = arith.addf %154, %156 : vector<2x512xf32>
    %158 = vector.extract_strided_slice %157 {offsets = [0, 0], sizes = [2, 384], strides = [1, 1]} : vector<2x512xf32> to vector<2x384xf32>
    %159 = arith.negf %158 : vector<2x384xf32>
    %160 = math.exp %159 : vector<2x384xf32>
    %cst_58 = arith.constant 1.000000e+00 : f32
    %161 = vector.broadcast %cst_58 : f32 to vector<2x384xf32>
    %162 = arith.addf %161, %160 : vector<2x384xf32>
    %163 = arith.divf %161, %162 : vector<2x384xf32>
    %164 = vector.extract_strided_slice %163 {offsets = [0, 0], sizes = [2, 128], strides = [1, 1]} : vector<2x384xf32> to vector<2x128xf32>
    %165 = vector.extract_strided_slice %163 {offsets = [0, 128], sizes = [2, 128], strides = [1, 1]} : vector<2x384xf32> to vector<2x128xf32>
    %166 = vector.extract_strided_slice %163 {offsets = [0, 256], sizes = [2, 128], strides = [1, 1]} : vector<2x384xf32> to vector<2x128xf32>
    %167 = vector.extract_strided_slice %157 {offsets = [0, 384], sizes = [2, 128], strides = [1, 1]} : vector<2x512xf32> to vector<2x128xf32>
    %168 = math.tanh %167 : vector<2x128xf32>
    %169 = arith.mulf %165, %149 : vector<2x128xf32>
    %170 = arith.mulf %164, %168 : vector<2x128xf32>
    %171 = arith.addf %169, %170 : vector<2x128xf32>
    %172 = math.tanh %171 : vector<2x128xf32>
    %173 = arith.mulf %166, %172 : vector<2x128xf32>
    %c7_i32 = arith.constant 7 : i32
    %174 = arith.index_cast %c7_i32 : i32 to index
    %c0_59 = arith.constant 0 : index
    %c0_60 = arith.constant 0 : index
    %175 = vector.load %arg5[%174, %c0_59, %c0_60] : memref<8x2x512xf32, #tpu.memory_space<vmem>>, vector<1x2x512xf32>
    %176 = vector.shape_cast %175 : vector<1x2x512xf32> to vector<2x512xf32>
    %c0_61 = arith.constant 0 : index
    %c0_62 = arith.constant 0 : index
    %177 = vector.load %arg2[%c0_61, %c0_62] : memref<128x512xf32, #tpu.memory_space<vmem>>, vector<128x512xf32>
    %cst_63 = arith.constant dense<0.000000e+00> : vector<2x512xf32>
    %178 = tpu.matmul %173, %177, %cst_63 {dimension_numbers = #tpu.dot_dimension_numbers<[1], [0], [0], [1], [0, 0, 1, 1], [], []>} : vector<2x128xf32>, vector<128x512xf32>, vector<2x512xf32> -> vector<2x512xf32>
    %179 = arith.addf %176, %178 : vector<2x512xf32>
    %180 = vector.extract_strided_slice %179 {offsets = [0, 0], sizes = [2, 384], strides = [1, 1]} : vector<2x512xf32> to vector<2x384xf32>
    %181 = arith.negf %180 : vector<2x384xf32>
    %182 = math.exp %181 : vector<2x384xf32>
    %cst_64 = arith.constant 1.000000e+00 : f32
    %183 = vector.broadcast %cst_64 : f32 to vector<2x384xf32>
    %184 = arith.addf %183, %182 : vector<2x384xf32>
    %185 = arith.divf %183, %184 : vector<2x384xf32>
    %186 = vector.extract_strided_slice %185 {offsets = [0, 0], sizes = [2, 128], strides = [1, 1]} : vector<2x384xf32> to vector<2x128xf32>
    %187 = vector.extract_strided_slice %185 {offsets = [0, 128], sizes = [2, 128], strides = [1, 1]} : vector<2x384xf32> to vector<2x128xf32>
    %188 = vector.extract_strided_slice %185 {offsets = [0, 256], sizes = [2, 128], strides = [1, 1]} : vector<2x384xf32> to vector<2x128xf32>
    %189 = vector.extract_strided_slice %179 {offsets = [0, 384], sizes = [2, 128], strides = [1, 1]} : vector<2x512xf32> to vector<2x128xf32>
    %190 = math.tanh %189 : vector<2x128xf32>
    %191 = arith.mulf %187, %171 : vector<2x128xf32>
    %192 = arith.mulf %186, %190 : vector<2x128xf32>
    %193 = arith.addf %191, %192 : vector<2x128xf32>
    %194 = math.tanh %193 : vector<2x128xf32>
    %195 = arith.mulf %188, %194 : vector<2x128xf32>
    %c8_i32 = arith.constant 8 : i32
    %c0_65 = arith.constant 0 : index
    %c0_66 = arith.constant 0 : index
    %196 = vector.load %arg4[%c0_65, %c0_66] : memref<2x128xf32, #tpu.memory_space<vmem>>, vector<2x128xf32>
    tpu.vector_store %arg4[%c0_65, %c0_66], %195 {strides = array<i32>} : memref<2x128xf32, #tpu.memory_space<vmem>>, vector<2x128xf32>,
    return
  }
}

</mosaic_0001>

<llo_original>
// kernel: _lambda_.1
$region0: #{_lambda_.1}
  #allocation0 [shape = 'u32[]', space=smem, size = 0x4, offset = 0x4, fixed_abs, tag = 'smem constant byte address 0x4 - core index']
  #allocation1 [shape = 'u32[144,128]{1,0:T(1,128)}', space=vmem, size = 0x12000, scoped, tag = 'internal scratch']
  #allocation2 [shape = 'f32[8,2,512]{2,1,0:T(2,128)}', space=vmem, size = 0x8000, scoped, tag = 'scratch operand']
  %s0 = inlined_call_operand.vmem [shape: f32[2,8,16], index: 0, kind: input, shape index: {}]
  %s1 = inlined_call_operand.vmem [shape: f32[16,512], index: 1, kind: input, shape index: {}]
  %s2 = inlined_call_operand.vmem [shape: f32[128,512], index: 2, kind: input, shape index: {}]
  %s3 = inlined_call_operand.vmem [shape: f32[1,512], index: 3, kind: input, shape index: {}]
  %s4 = inlined_call_operand.hbm [shape: f32[2,128], index: 4, kind: output, shape index: {}]
  %s5 = sld [smem:[#allocation0]]
  $region26: #{_lambda_.1} parent=0
    _
  %s7 = ssub.s32 1, %s5
  %s8 = scalar_select 0, %s7, %s5
  $region1: #{_lambda_.1} parent=0
    #allocation3 [shape = 'u8[1024]{0}', space=vmem, size = 0x400, scoped, tag = 'output window, operand 0, single buffered']
    #allocation4 [shape = 's32[1]{0}', space=sflag, size = 0x4, scoped, tag = 'scoped memory for _lambda_.1']
    %9 = vsyncpa [#allocation4], 0
    // Predicated region
    $region2: #{_lambda_.1} parent=1 // pred_check
      _
    $region3: #{_lambda_.1} parent=1 // pred_check_branch
      %11 = sbr.rel (0) target = $region5
    $region4: #{_lambda_.1} parent=1 // pred_region
      _
    $region5: #{_lambda_.1} parent=1 // pred_fallthru
      _
    // Predicated region
    $region6: #{_lambda_.1} parent=1 // pred_check
      _
    $region7: #{_lambda_.1} parent=1 // pred_check_branch
      %13 = sbr.rel (0) target = $region9
    $region8: #{_lambda_.1} parent=1 // pred_region
      _
    $region9: #{_lambda_.1} parent=1 // pred_fallthru
      _
    // Predicated region
    $region10: #{_lambda_.1} parent=1 // pred_check
      _
    $region11: #{_lambda_.1} parent=1 // pred_check_branch
      %15 = sbr.rel (0) target = $region13
    $region12: #{_lambda_.1} parent=1 // pred_region
      _
    $region13: #{_lambda_.1} parent=1 // pred_fallthru
      _
    // Predicated region
    $region14: #{_lambda_.1} parent=1 // pred_check
      _
    $region15: #{_lambda_.1} parent=1 // pred_check_branch
      %17 = sbr.rel (0) target = $region17
    $region16: #{_lambda_.1} parent=1 // pred_region
      _
    $region17: #{_lambda_.1} parent=1 // pred_fallthru
      _
    %v18 = vld [vmem:[%s1] sm:$0xff]
    %v19 = vld [vmem:[%s1 + $0x8] sm:$0xff]
    %v20 = vld [vmem:[%s1 + $0x10] sm:$0xff]
    %v21 = vld [vmem:[%s1 + $0x18] sm:$0xff]
    %v22 = vld [vmem:[%s1 + $0x20] sm:$0xff]
    %v23 = vld [vmem:[%s1 + $0x28] sm:$0xff]
    %v24 = vld [vmem:[%s1 + $0x30] sm:$0xff]
    %v25 = vld [vmem:[%s1 + $0x38] sm:$0xff]
    %v26 = vld [vmem:[%s3] sm:$0xf]
    %v27 = vld [vmem:[%s0] sm:$0xff]
    %v29 = vlaneseq
    %v30 = vshrl.u32 %v29, 7
    %v31 = vsub.s32 0, %v30
    %v32 = vrot.slane %v26, %v31
    %v33 = vlaneseq
    %v34 = vshrl.u32 %v33, 7
    %v35 = vsub.s32 1, %v34
    %v36 = vrot.slane %v26, %v35
    %v37 = vlaneseq
    %v38 = vshrl.u32 %v37, 7
    %v39 = vsub.s32 2, %v38
    %v40 = vrot.slane %v26, %v39
    %v41 = vlaneseq
    %v42 = vshrl.u32 %v41, 7
    %v43 = vsub.s32 3, %v42
    %v44 = vrot.slane %v26, %v43
    %vm49 = vcmask 130048
    %v51 = vsel %vm49, %v27, 0
    %53 = vmatprep.subr.mxu0 %v19
    %54 = vmatpush1.msra.mxu0 %v18
    %55 = vmatprep.subr.mxu0 %v23
    %56 = vmatpush1.msra.mxu0 %v22
    %57 = vmatprep.subr.mxu0 0.0
    %58 = vmatpush1.msra.mxu0 0.0
    %59 = vmatprep.subr.mxu0 0.0
    %60 = vmatpush1.msra.mxu0 0.0
    %61 = vmatprep.subr.mxu0 0.0
    %62 = vmatpush1.msra.mxu0 0.0
    %63 = vmatprep.subr.mxu0 0.0
    %64 = vmatpush1.msra.mxu0 0.0
    %65 = vmatprep.subr.mxu0 0.0
    %66 = vmatpush1.msra.mxu0 0.0
    %67 = vmatprep.subr.mxu0 0.0
    %68 = vmatpush1.msra.mxu0 0.0
    %69 = vmatprep.subr.mxu0 0.0
    %70 = vmatpush1.msra.mxu0 0.0
    %71 = vmatprep.subr.mxu0 0.0
    %72 = vmatpush1.msra.mxu0 0.0
    %73 = vmatprep.subr.mxu0 0.0
    %74 = vmatpush1.msra.mxu0 0.0
    %75 = vmatprep.subr.mxu0 0.0
    %76 = vmatpush1.msra.mxu0 0.0
    %77 = vmatprep.subr.mxu0 0.0
    %78 = vmatpush1.msra.mxu0 0.0
    %79 = vmatprep.subr.mxu0 0.0
    %80 = vmatpush1.msra.mxu0 0.0
    %81 = vmatprep.subr.mxu0 0.0
    %82 = vmatpush1.msra.mxu0 0.0
    %83 = vmatprep.subr.mxu0 0.0
    %84 = vmatpush1.msra.mxu0 0.0
    %85 = vmatprep.subr.mxu0 0.0
    %86 = vmatpush1.msra.mxu0 0.0
    %87 = vmatprep.subr.mxu0 0.0
    %88 = vmatpush1.msra.mxu0 0.0
    %89 = vmatprep.subr.mxu0 0.0
    %90 = vmatpush1.msra.mxu0 0.0
    %91 = vmatprep.subr.mxu0 0.0
    %92 = vmatpush1.msra.mxu0 0.0
    %93 = vmatprep.subr.mxu0 0.0
    %94 = vmatpush1.msra.mxu0 0.0
    %95 = vmatprep.subr.mxu0 0.0
    %96 = vmatpush1.msra.mxu0 0.0
    %97 = vmatprep.subr.mxu0 0.0
    %98 = vmatpush1.msra.mxu0 0.0
    %99 = vmatprep.subr.mxu0 0.0
    %100 = vmatpush1.msra.mxu0 0.0
    %101 = vmatprep.subr.mxu0 0.0
    %102 = vmatpush1.msra.mxu0 0.0
    %103 = vmatprep.subr.mxu0 0.0
    %104 = vmatpush1.msra.mxu0 0.0
    %105 = vmatprep.subr.mxu0 0.0
    %106 = vmatpush1.msra.mxu0 0.0
    %107 = vmatprep.subr.mxu0 0.0
    %108 = vmatpush1.msra.mxu0 0.0
    %109 = vmatprep.subr.mxu0 0.0
    %110 = vmatpush1.msra.mxu0 0.0
    %111 = vmatprep.subr.mxu0 0.0
    %112 = vmatpush1.msra.mxu0 0.0
    %113 = vmatprep.subr.mxu0 0.0
    %114 = vmatpush1.msra.mxu0 0.0
    %115 = vmatprep.subr.mxu0 0.0
    %116 = vmatpush1.msra.mxu0 0.0
    %117 = vmatprep.mubr.f32.mxu0 0.0
    %118 = vmatmul.mubr.f32.gmra.mrb[0].mxu0 %v51
    %v119 = vpop.f32.mrb[0].mxu0
    %v120 = vadd.f32 %v32, %v119
    %v121 = vpop.f32.mrb[0].mxu0
    %v122 = vadd.f32 %v36, %v121
    %123 = vdwg.mxu0
    %124 = vmatprep.subr.mxu0 %v21
    %125 = vmatpush1.msra.mxu0 %v20
    %126 = vmatprep.subr.mxu0 %v25
    %127 = vmatpush1.msra.mxu0 %v24
    %128 = vmatprep.subr.mxu0 0.0
    %129 = vmatpush1.msra.mxu0 0.0
    %130 = vmatprep.subr.mxu0 0.0
    %131 = vmatpush1.msra.mxu0 0.0
    %132 = vmatprep.subr.mxu0 0.0
    %133 = vmatpush1.msra.mxu0 0.0
    %134 = vmatprep.subr.mxu0 0.0
    %135 = vmatpush1.msra.mxu0 0.0
    %136 = vmatprep.subr.mxu0 0.0
    %137 = vmatpush1.msra.mxu0 0.0
    %138 = vmatprep.subr.mxu0 0.0
    %139 = vmatpush1.msra.mxu0 0.0
    %140 = vmatprep.subr.mxu0 0.0
    %141 = vmatpush1.msra.mxu0 0.0
    %142 = vmatprep.subr.mxu0 0.0
    %143 = vmatpush1.msra.mxu0 0.0
    %144 = vmatprep.subr.mxu0 0.0
    %145 = vmatpush1.msra.mxu0 0.0
    %146 = vmatprep.subr.mxu0 0.0
    %147 = vmatpush1.msra.mxu0 0.0
    %148 = vmatprep.subr.mxu0 0.0
    %149 = vmatpush1.msra.mxu0 0.0
    %150 = vmatprep.subr.mxu0 0.0
    %151 = vmatpush1.msra.mxu0 0.0
    %152 = vmatprep.subr.mxu0 0.0
    %153 = vmatpush1.msra.mxu0 0.0
    %154 = vmatprep.subr.mxu0 0.0
    %155 = vmatpush1.msra.mxu0 0.0
    %156 = vmatprep.subr.mxu0 0.0
    %157 = vmatpush1.msra.mxu0 0.0
    %158 = vmatprep.subr.mxu0 0.0
    %159 = vmatpush1.msra.mxu0 0.0
    %160 = vmatprep.subr.mxu0 0.0
    %161 = vmatpush1.msra.mxu0 0.0
    %162 = vmatprep.subr.mxu0 0.0
    %163 = vmatpush1.msra.mxu0 0.0
    %164 = vmatprep.subr.mxu0 0.0
    %165 = vmatpush1.msra.mxu0 0.0
    %166 = vmatprep.subr.mxu0 0.0
    %167 = vmatpush1.msra.mxu0 0.0
    %168 = vmatprep.subr.mxu0 0.0
    %169 = vmatpush1.msra.mxu0 0.0
    %170 = vmatprep.subr.mxu0 0.0
    %171 = vmatpush1.msra.mxu0 0.0
    %172 = vmatprep.subr.mxu0 0.0
    %173 = vmatpush1.msra.mxu0 0.0
    %174 = vmatprep.subr.mxu0 0.0
    %175 = vmatpush1.msra.mxu0 0.0
    %176 = vmatprep.subr.mxu0 0.0
    %177 = vmatpush1.msra.mxu0 0.0
    %178 = vmatprep.subr.mxu0 0.0
    %179 = vmatpush1.msra.mxu0 0.0
    %180 = vmatprep.subr.mxu0 0.0
    %181 = vmatpush1.msra.mxu0 0.0
    %182 = vmatprep.subr.mxu0 0.0
    %183 = vmatpush1.msra.mxu0 0.0
    %184 = vmatprep.subr.mxu0 0.0
    %185 = vmatpush1.msra.mxu0 0.0
    %186 = vmatprep.subr.mxu0 0.0
    %187 = vmatpush1.msra.mxu0 0.0
    %188 = vmatprep.mubr.f32.mxu0 0.0
    %189 = vmatmul.mubr.f32.gmra.mrb[0].mxu0 %v51
    %v190 = vpop.f32.mrb[0].mxu0
    %v191 = vadd.f32 %v40, %v190
    %v192 = vpop.f32.mrb[0].mxu0
    %v193 = vadd.f32 %v44, %v192
    %194 = vdwg.mxu0
    %v199 = vcombine.low %v120, %v122
    %v200 = vcombine.high %v120, %v122
    %v201 = vcombine.low %v191, %v193
    %v202 = vcombine.high %v191, %v193
    %v204 = vunpack.c.l.s4 1966171168
    %v205 = vunpack.c.0.s8 %v204
    %v206 = vlaneseq
    %v207 = vshrl.u32 %v206, 7
    %v208 = vsub.s32 %v205, %v207
    %v209 = vrot.slane %v199, %v208
    %v211 = vunpack.c.l.s4 1966171168
    %v212 = vunpack.c.0.s8 %v211
    %v213 = vlaneseq
    %v214 = vshrl.u32 %v213, 7
    %v215 = vsub.s32 %v212, %v214
    %v216 = vrot.slane %v200, %v215
    %v218 = vunpack.c.l.s4 1966171168
    %v219 = vunpack.c.0.s8 %v218
    %v220 = vlaneseq
    %v221 = vshrl.u32 %v220, 7
    %v222 = vsub.s32 %v219, %v221
    %v223 = vrot.slane %v201, %v222
    %v225 = vunpack.c.l.s4 1966171168
    %v226 = vunpack.c.0.s8 %v225
    %v227 = vlaneseq
    %v228 = vshrl.u32 %v227, 7
    %v229 = vsub.s32 %v226, %v228
    %v230 = vrot.slane %v202, %v229
    %v231 = vcombine.low %v209, %v223
    %v232 = vcombine.high %v209, %v223
    %v233 = vcombine.low %v216, %v230
    %v234 = vcombine.high %v216, %v230
    %v236 = vunpack.c.l.s4 1966171168
    %v237 = vunpack.c.0.s8 %v236
    %v238 = vlaneseq
    %v239 = vshrl.u32 %v238, 7
    %v240 = vsub.s32 %v237, %v239
    %v241 = vrot.slane %v231, %v240
    %v243 = vunpack.c.l.s4 1966171168
    %v244 = vunpack.c.0.s8 %v243
    %v245 = vlaneseq
    %v246 = vshrl.u32 %v245, 7
    %v247 = vsub.s32 %v244, %v246
    %v248 = vrot.slane %v233, %v247
    %v250 = vunpack.c.l.s4 1966171168
    %v251 = vunpack.c.0.s8 %v250
    %v252 = vlaneseq
    %v253 = vshrl.u32 %v252, 7
    %v254 = vsub.s32 %v251, %v253
    %v255 = vrot.slane %v232, %v254
    %v257 = vunpack.c.l.s4 1966171168
    %v258 = vunpack.c.0.s8 %v257
    %v259 = vlaneseq
    %v260 = vshrl.u32 %v259, 7
    %v261 = vsub.s32 %v258, %v260
    %v262 = vrot.slane %v234, %v261
    %v263 = vcombine.high %v241, %v241
    %v264 = vcombine.high %v248, %v248
    %v265 = vcombine.high %v255, %v255
    %v266 = vcombine.high %v262, %v262
    %v275 = vlaneseq
    %vm276 = vcmp.ge.s32.totalorder %v275, 0
    %vm277 = vcmp.lt.s32.totalorder %v275, 512
    %vm278 = vmand %vm276, %vm277
    %279 = vst.msk [vmem:[#allocation2] ss:$2 sm:$0xf] %vm278, %v241
    %s280 = scalar_lea.vmem [#allocation2], 8
    %281 = vst.msk [vmem:[%s280] ss:$2 sm:$0xf] %vm278, %v255
    %s282 = scalar_lea.vmem [#allocation2], 16
    %283 = vst.msk [vmem:[%s282] ss:$2 sm:$0xf] %vm278, %v263
    %s284 = scalar_lea.vmem [#allocation2], 24
    %285 = vst.msk [vmem:[%s284] ss:$2 sm:$0xf] %vm278, %v265
    %s286 = scalar_lea.vmem [#allocation2], 32
    %287 = vst.msk [vmem:[%s286] ss:$2 sm:$0xf] %vm278, %v248
    %s288 = scalar_lea.vmem [#allocation2], 40
    %289 = vst.msk [vmem:[%s288] ss:$2 sm:$0xf] %vm278, %v262
    %s290 = scalar_lea.vmem [#allocation2], 48
    %291 = vst.msk [vmem:[%s290] ss:$2 sm:$0xf] %vm278, %v264
    %s292 = scalar_lea.vmem [#allocation2], 56
    %293 = vst.msk [vmem:[%s292] ss:$2 sm:$0xf] %vm278, %v266
    %s294 = scalar_lea.vmem %s0, 8
    %v295 = vld [vmem:[%s294] sm:$0xff]
    %v297 = vsel %vm49, %v295, 0
    %299 = vmatprep.subr.mxu0 %v19
    %300 = vmatpush1.msra.mxu0 %v18
    %301 = vmatprep.subr.mxu0 %v23
    %302 = vmatpush1.msra.mxu0 %v22
    %303 = vmatprep.subr.mxu0 0.0
    %304 = vmatpush1.msra.mxu0 0.0
    %305 = vmatprep.subr.mxu0 0.0
    %306 = vmatpush1.msra.mxu0 0.0
    %307 = vmatprep.subr.mxu0 0.0
    %308 = vmatpush1.msra.mxu0 0.0
    %309 = vmatprep.subr.mxu0 0.0
    %310 = vmatpush1.msra.mxu0 0.0
    %311 = vmatprep.subr.mxu0 0.0
    %312 = vmatpush1.msra.mxu0 0.0
    %313 = vmatprep.subr.mxu0 0.0
    %314 = vmatpush1.msra.mxu0 0.0
    %315 = vmatprep.subr.mxu0 0.0
    %316 = vmatpush1.msra.mxu0 0.0
    %317 = vmatprep.subr.mxu0 0.0
    %318 = vmatpush1.msra.mxu0 0.0
    %319 = vmatprep.subr.mxu0 0.0
    %320 = vmatpush1.msra.mxu0 0.0
    %321 = vmatprep.subr.mxu0 0.0
    %322 = vmatpush1.msra.mxu0 0.0
    %323 = vmatprep.subr.mxu0 0.0
    %324 = vmatpush1.msra.mxu0 0.0
    %325 = vmatprep.subr.mxu0 0.0
    %326 = vmatpush1.msra.mxu0 0.0
    %327 = vmatprep.subr.mxu0 0.0
    %328 = vmatpush1.msra.mxu0 0.0
    %329 = vmatprep.subr.mxu0 0.0
    %330 = vmatpush1.msra.mxu0 0.0
    %331 = vmatprep.subr.mxu0 0.0
    %332 = vmatpush1.msra.mxu0 0.0
    %333 = vmatprep.subr.mxu0 0.0
    %334 = vmatpush1.msra.mxu0 0.0
    %335 = vmatprep.subr.mxu0 0.0
    %336 = vmatpush1.msra.mxu0 0.0
    %337 = vmatprep.subr.mxu0 0.0
    %338 = vmatpush1.msra.mxu0 0.0
    %339 = vmatprep.subr.mxu0 0.0
    %340 = vmatpush1.msra.mxu0 0.0
    %341 = vmatprep.subr.mxu0 0.0
    %342 = vmatpush1.msra.mxu0 0.0
    %343 = vmatprep.subr.mxu0 0.0
    %344 = vmatpush1.msra.mxu0 0.0
    %345 = vmatprep.subr.mxu0 0.0
    %346 = vmatpush1.msra.mxu0 0.0
    %347 = vmatprep.subr.mxu0 0.0
    %348 = vmatpush1.msra.mxu0 0.0
    %349 = vmatprep.subr.mxu0 0.0
    %350 = vmatpush1.msra.mxu0 0.0
    %351 = vmatprep.subr.mxu0 0.0
    %352 = vmatpush1.msra.mxu0 0.0
    %353 = vmatprep.subr.mxu0 0.0
    %354 = vmatpush1.msra.mxu0 0.0
    %355 = vmatprep.subr.mxu0 0.0
    %356 = vmatpush1.msra.mxu0 0.0
    %357 = vmatprep.subr.mxu0 0.0
    %358 = vmatpush1.msra.mxu0 0.0
    %359 = vmatprep.subr.mxu0 0.0
    %360 = vmatpush1.msra.mxu0 0.0
    %361 = vmatprep.subr.mxu0 0.0
    %362 = vmatpush1.msra.mxu0 0.0
    %363 = vmatprep.mubr.f32.mxu0 0.0
    %364 = vmatmul.mubr.f32.gmra.mrb[0].mxu0 %v297
    %v365 = vpop.f32.mrb[0].mxu0
    %v366 = vadd.f32 %v32, %v365
    %v367 = vpop.f32.mrb[0].mxu0
    %v368 = vadd.f32 %v36, %v367
    %369 = vdwg.mxu0
    %370 = vmatprep.subr.mxu0 %v21
    %371 = vmatpush1.msra.mxu0 %v20
    %372 = vmatprep.subr.mxu0 %v25
    %373 = vmatpush1.msra.mxu0 %v24
    %374 = vmatprep.subr.mxu0 0.0
    %375 = vmatpush1.msra.mxu0 0.0
    %376 = vmatprep.subr.mxu0 0.0
    %377 = vmatpush1.msra.mxu0 0.0
    %378 = vmatprep.subr.mxu0 0.0
    %379 = vmatpush1.msra.mxu0 0.0
    %380 = vmatprep.subr.mxu0 0.0
    %381 = vmatpush1.msra.mxu0 0.0
    %382 = vmatprep.subr.mxu0 0.0
    %383 = vmatpush1.msra.mxu0 0.0
    %384 = vmatprep.subr.mxu0 0.0
    %385 = vmatpush1.msra.mxu0 0.0
    %386 = vmatprep.subr.mxu0 0.0
    %387 = vmatpush1.msra.mxu0 0.0
    %388 = vmatprep.subr.mxu0 0.0
    %389 = vmatpush1.msra.mxu0 0.0
    %390 = vmatprep.subr.mxu0 0.0
    %391 = vmatpush1.msra.mxu0 0.0
    %392 = vmatprep.subr.mxu0 0.0
    %393 = vmatpush1.msra.mxu0 0.0
    %394 = vmatprep.subr.mxu0 0.0
    %395 = vmatpush1.msra.mxu0 0.0
    %396 = vmatprep.subr.mxu0 0.0
    %397 = vmatpush1.msra.mxu0 0.0
    %398 = vmatprep.subr.mxu0 0.0
    %399 = vmatpush1.msra.mxu0 0.0
    %400 = vmatprep.subr.mxu0 0.0
    %401 = vmatpush1.msra.mxu0 0.0
    %402 = vmatprep.subr.mxu0 0.0
    %403 = vmatpush1.msra.mxu0 0.0
    %404 = vmatprep.subr.mxu0 0.0
    %405 = vmatpush1.msra.mxu0 0.0
    %406 = vmatprep.subr.mxu0 0.0
    %407 = vmatpush1.msra.mxu0 0.0
    %408 = vmatprep.subr.mxu0 0.0
    %409 = vmatpush1.msra.mxu0 0.0
    %410 = vmatprep.subr.mxu0 0.0
    %411 = vmatpush1.msra.mxu0 0.0
    %412 = vmatprep.subr.mxu0 0.0
    %413 = vmatpush1.msra.mxu0 0.0
    %414 = vmatprep.subr.mxu0 0.0
    %415 = vmatpush1.msra.mxu0 0.0
    %416 = vmatprep.subr.mxu0 0.0
    %417 = vmatpush1.msra.mxu0 0.0
    %418 = vmatprep.subr.mxu0 0.0
    %419 = vmatpush1.msra.mxu0 0.0
    %420 = vmatprep.subr.mxu0 0.0
    %421 = vmatpush1.msra.mxu0 0.0
    %422 = vmatprep.subr.mxu0 0.0
    %423 = vmatpush1.msra.mxu0 0.0
    %424 = vmatprep.subr.mxu0 0.0
    %425 = vmatpush1.msra.mxu0 0.0
    %426 = vmatprep.subr.mxu0 0.0
    %427 = vmatpush1.msra.mxu0 0.0
    %428 = vmatprep.subr.mxu0 0.0
    %429 = vmatpush1.msra.mxu0 0.0
    %430 = vmatprep.subr.mxu0 0.0
    %431 = vmatpush1.msra.mxu0 0.0
    %432 = vmatprep.subr.mxu0 0.0
    %433 = vmatpush1.msra.mxu0 0.0
    %434 = vmatprep.mubr.f32.mxu0 0.0
    %435 = vmatmul.mubr.f32.gmra.mrb[0].mxu0 %v297
    %v436 = vpop.f32.mrb[0].mxu0
    %v437 = vadd.f32 %v40, %v436
    %v438 = vpop.f32.mrb[0].mxu0
    %v439 = vadd.f32 %v44, %v438
    %440 = vdwg.mxu0
    %v445 = vcombine.low %v366, %v368
    %v446 = vcombine.high %v366, %v368
    %v447 = vcombine.low %v437, %v439
    %v448 = vcombine.high %v437, %v439
    %v450 = vunpack.c.l.s4 1966171168
    %v451 = vunpack.c.0.s8 %v450
    %v452 = vlaneseq
    %v453 = vshrl.u32 %v452, 7
    %v454 = vsub.s32 %v451, %v453
    %v455 = vrot.slane %v445, %v454
    %v457 = vunpack.c.l.s4 1966171168
    %v458 = vunpack.c.0.s8 %v457
    %v459 = vlaneseq
    %v460 = vshrl.u32 %v459, 7
    %v461 = vsub.s32 %v458, %v460
    %v462 = vrot.slane %v446, %v461
    %v464 = vunpack.c.l.s4 1966171168
    %v465 = vunpack.c.0.s8 %v464
    %v466 = vlaneseq
    %v467 = vshrl.u32 %v466, 7
    %v468 = vsub.s32 %v465, %v467
    %v469 = vrot.slane %v447, %v468
    %v471 = vunpack.c.l.s4 1966171168
    %v472 = vunpack.c.0.s8 %v471
    %v473 = vlaneseq
    %v474 = vshrl.u32 %v473, 7
    %v475 = vsub.s32 %v472, %v474
    %v476 = vrot.slane %v448, %v475
    %v477 = vcombine.low %v455, %v469
    %v478 = vcombine.high %v455, %v469
    %v479 = vcombine.low %v462, %v476
    %v480 = vcombine.high %v462, %v476
    %v482 = vunpack.c.l.s4 1966171168
    %v483 = vunpack.c.0.s8 %v482
    %v484 = vlaneseq
    %v485 = vshrl.u32 %v484, 7
    %v486 = vsub.s32 %v483, %v485
    %v487 = vrot.slane %v477, %v486
    %v489 = vunpack.c.l.s4 1966171168
    %v490 = vunpack.c.0.s8 %v489
    %v491 = vlaneseq
    %v492 = vshrl.u32 %v491, 7
    %v493 = vsub.s32 %v490, %v492
    %v494 = vrot.slane %v479, %v493
    %v496 = vunpack.c.l.s4 1966171168
    %v497 = vunpack.c.0.s8 %v496
    %v498 = vlaneseq
    %v499 = vshrl.u32 %v498, 7
    %v500 = vsub.s32 %v497, %v499
    %v501 = vrot.slane %v478, %v500
    %v503 = vunpack.c.l.s4 1966171168
    %v504 = vunpack.c.0.s8 %v503
    %v505 = vlaneseq
    %v506 = vshrl.u32 %v505, 7
    %v507 = vsub.s32 %v504, %v506
    %v508 = vrot.slane %v480, %v507
    %v509 = vcombine.high %v487, %v487
    %v510 = vcombine.high %v494, %v494
    %v511 = vcombine.high %v501, %v501
    %v512 = vcombine.high %v508, %v508
    %s521 = scalar_lea.vmem [#allocation2], 1
    %522 = vst.msk [vmem:[%s521] ss:$2 sm:$0xf] %vm278, %v487
    %s523 = scalar_lea.vmem [#allocation2], 9
    %524 = vst.msk [vmem:[%s523] ss:$2 sm:$0xf] %vm278, %v501
    %s525 = scalar_lea.vmem [#allocation2], 17
    %526 = vst.msk [vmem:[%s525] ss:$2 sm:$0xf] %vm278, %v509
    %s527 = scalar_lea.vmem [#allocation2], 25
    %528 = vst.msk [vmem:[%s527] ss:$2 sm:$0xf] %vm278, %v511
    %s529 = scalar_lea.vmem [#allocation2], 33
    %530 = vst.msk [vmem:[%s529] ss:$2 sm:$0xf] %vm278, %v494
    %s531 = scalar_lea.vmem [#allocation2], 41
    %532 = vst.msk [vmem:[%s531] ss:$2 sm:$0xf] %vm278, %v508
    %s533 = scalar_lea.vmem [#allocation2], 49
    %534 = vst.msk [vmem:[%s533] ss:$2 sm:$0xf] %vm278, %v510
    %s535 = scalar_lea.vmem [#allocation2], 57
    %536 = vst.msk [vmem:[%s535] ss:$2 sm:$0xf] %vm278, %v512
    %v537 = vld [vmem:[#allocation2] sm:$0xff]
    %v538 = vld [vmem:[%s2] sm:$0xff]
    %v539 = vld [vmem:[%s2 + $0x8] sm:$0xff]
    %v540 = vld [vmem:[%s2 + $0x10] sm:$0xff]
    %v541 = vld [vmem:[%s2 + $0x18] sm:$0xff]
    %v542 = vld [vmem:[%s2 + $0x20] sm:$0xff]
    %v543 = vld [vmem:[%s2 + $0x28] sm:$0xff]
    %v544 = vld [vmem:[%s2 + $0x30] sm:$0xff]
    %v545 = vld [vmem:[%s2 + $0x38] sm:$0xff]
    %v546 = vld [vmem:[%s2 + $0x40] sm:$0xff]
    %v547 = vld [vmem:[%s2 + $0x48] sm:$0xff]
    %v548 = vld [vmem:[%s2 + $0x50] sm:$0xff]
    %v549 = vld [vmem:[%s2 + $0x58] sm:$0xff]
    %v550 = vld [vmem:[%s2 + $0x60] sm:$0xff]
    %v551 = vld [vmem:[%s2 + $0x68] sm:$0xff]
    %v552 = vld [vmem:[%s2 + $0x70] sm:$0xff]
    %v553 = vld [vmem:[%s2 + $0x78] sm:$0xff]
    %v554 = vld [vmem:[%s2 + $0x80] sm:$0xff]
    %v555 = vld [vmem:[%s2 + $0x88] sm:$0xff]
    %v556 = vld [vmem:[%s2 + $0x90] sm:$0xff]
    %v557 = vld [vmem:[%s2 + $0x98] sm:$0xff]
    %v558 = vld [vmem:[%s2 + $0xa0] sm:$0xff]
    %v559 = vld [vmem:[%s2 + $0xa8] sm:$0xff]
    %v560 = vld [vmem:[%s2 + $0xb0] sm:$0xff]
    %v561 = vld [vmem:[%s2 + $0xb8] sm:$0xff]
    %v562 = vld [vmem:[%s2 + $0xc0] sm:$0xff]
    %v563 = vld [vmem:[%s2 + $0xc8] sm:$0xff]
    %v564 = vld [vmem:[%s2 + $0xd0] sm:$0xff]
    %v565 = vld [vmem:[%s2 + $0xd8] sm:$0xff]
    %v566 = vld [vmem:[%s2 + $0xe0] sm:$0xff]
    %v567 = vld [vmem:[%s2 + $0xe8] sm:$0xff]
    %v568 = vld [vmem:[%s2 + $0xf0] sm:$0xff]
    %v569 = vld [vmem:[%s2 + $0xf8] sm:$0xff]
    %v570 = vld [vmem:[%s2 + $0x100] sm:$0xff]
    %v571 = vld [vmem:[%s2 + $0x108] sm:$0xff]
    %v572 = vld [vmem:[%s2 + $0x110] sm:$0xff]
    %v573 = vld [vmem:[%s2 + $0x118] sm:$0xff]
    %v574 = vld [vmem:[%s2 + $0x120] sm:$0xff]
    %v575 = vld [vmem:[%s2 + $0x128] sm:$0xff]
    %v576 = vld [vmem:[%s2 + $0x130] sm:$0xff]
    %v577 = vld [vmem:[%s2 + $0x138] sm:$0xff]
    %v578 = vld [vmem:[%s2 + $0x140] sm:$0xff]
    %v579 = vld [vmem:[%s2 + $0x148] sm:$0xff]
    %v580 = vld [vmem:[%s2 + $0x150] sm:$0xff]
    %v581 = vld [vmem:[%s2 + $0x158] sm:$0xff]
    %v582 = vld [vmem:[%s2 + $0x160] sm:$0xff]
    %v583 = vld [vmem:[%s2 + $0x168] sm:$0xff]
    %v584 = vld [vmem:[%s2 + $0x170] sm:$0xff]
    %v585 = vld [vmem:[%s2 + $0x178] sm:$0xff]
    %v586 = vld [vmem:[%s2 + $0x180] sm:$0xff]
    %v587 = vld [vmem:[%s2 + $0x188] sm:$0xff]
    %v588 = vld [vmem:[%s2 + $0x190] sm:$0xff]
    %v589 = vld [vmem:[%s2 + $0x198] sm:$0xff]
    %v590 = vld [vmem:[%s2 + $0x1a0] sm:$0xff]
    %v591 = vld [vmem:[%s2 + $0x1a8] sm:$0xff]
    %v592 = vld [vmem:[%s2 + $0x1b0] sm:$0xff]
    %v593 = vld [vmem:[%s2 + $0x1b8] sm:$0xff]
    %v594 = vld [vmem:[%s2 + $0x1c0] sm:$0xff]
    %v595 = vld [vmem:[%s2 + $0x1c8] sm:$0xff]
    %v596 = vld [vmem:[%s2 + $0x1d0] sm:$0xff]
    %v597 = vld [vmem:[%s2 + $0x1d8] sm:$0xff]
    %v598 = vld [vmem:[%s2 + $0x1e0] sm:$0xff]
    %v599 = vld [vmem:[%s2 + $0x1e8] sm:$0xff]
    %v600 = vld [vmem:[%s2 + $0x1f0] sm:$0xff]
    %v601 = vld [vmem:[%s2 + $0x1f8] sm:$0xff]
    %602 = vmatprep.subr.mxu0 %v539
    %603 = vmatpush1.msra.mxu0 %v538
    %604 = vmatprep.subr.mxu0 %v543
    %605 = vmatpush1.msra.mxu0 %v542
    %606 = vmatprep.subr.mxu0 %v547
    %607 = vmatpush1.msra.mxu0 %v546
    %608 = vmatprep.subr.mxu0 %v551
    %609 = vmatpush1.msra.mxu0 %v550
    %610 = vmatprep.subr.mxu0 %v555
    %611 = vmatpush1.msra.mxu0 %v554
    %612 = vmatprep.subr.mxu0 %v559
    %613 = vmatpush1.msra.mxu0 %v558
    %614 = vmatprep.subr.mxu0 %v563
    %615 = vmatpush1.msra.mxu0 %v562
    %616 = vmatprep.subr.mxu0 %v567
    %617 = vmatpush1.msra.mxu0 %v566
    %618 = vmatprep.subr.mxu0 %v571
    %619 = vmatpush1.msra.mxu0 %v570
    %620 = vmatprep.subr.mxu0 %v575
    %621 = vmatpush1.msra.mxu0 %v574
    %622 = vmatprep.subr.mxu0 %v579
    %623 = vmatpush1.msra.mxu0 %v578
    %624 = vmatprep.subr.mxu0 %v583
    %625 = vmatpush1.msra.mxu0 %v582
    %626 = vmatprep.subr.mxu0 %v587
    %627 = vmatpush1.msra.mxu0 %v586
    %628 = vmatprep.subr.mxu0 %v591
    %629 = vmatpush1.msra.mxu0 %v590
    %630 = vmatprep.subr.mxu0 %v595
    %631 = vmatpush1.msra.mxu0 %v594
    %632 = vmatprep.subr.mxu0 %v599
    %633 = vmatpush1.msra.mxu0 %v598
    %634 = vmatprep.subr.mxu0 0.0
    %635 = vmatpush1.msra.mxu0 0.0
    %636 = vmatprep.subr.mxu0 0.0
    %637 = vmatpush1.msra.mxu0 0.0
    %638 = vmatprep.subr.mxu0 0.0
    %639 = vmatpush1.msra.mxu0 0.0
    %640 = vmatprep.subr.mxu0 0.0
    %641 = vmatpush1.msra.mxu0 0.0
    %642 = vmatprep.subr.mxu0 0.0
    %643 = vmatpush1.msra.mxu0 0.0
    %644 = vmatprep.subr.mxu0 0.0
    %645 = vmatpush1.msra.mxu0 0.0
    %646 = vmatprep.subr.mxu0 0.0
    %647 = vmatpush1.msra.mxu0 0.0
    %648 = vmatprep.subr.mxu0 0.0
    %649 = vmatpush1.msra.mxu0 0.0
    %650 = vmatprep.subr.mxu0 0.0
    %651 = vmatpush1.msra.mxu0 0.0
    %652 = vmatprep.subr.mxu0 0.0
    %653 = vmatpush1.msra.mxu0 0.0
    %654 = vmatprep.subr.mxu0 0.0
    %655 = vmatpush1.msra.mxu0 0.0
    %656 = vmatprep.subr.mxu0 0.0
    %657 = vmatpush1.msra.mxu0 0.0
    %658 = vmatprep.subr.mxu0 0.0
    %659 = vmatpush1.msra.mxu0 0.0
    %660 = vmatprep.subr.mxu0 0.0
    %661 = vmatpush1.msra.mxu0 0.0
    %662 = vmatprep.subr.mxu0 0.0
    %663 = vmatpush1.msra.mxu0 0.0
    %664 = vmatprep.subr.mxu0 0.0
    %665 = vmatpush1.msra.mxu0 0.0
    %666 = vmatprep.mubr.f32.mxu0 0.0
    %667 = vmatmul.mubr.f32.gmra.mrb[0].mxu0 0.0
    %v668 = vpop.f32.mrb[0].mxu0
    %v669 = vadd.f32 0.0, %v668
    %v670 = vpop.f32.mrb[0].mxu0
    %v671 = vadd.f32 0.0, %v670
    %672 = vdwg.mxu0
    %673 = vmatprep.subr.mxu0 %v541
    %674 = vmatpush1.msra.mxu0 %v540
    %675 = vmatprep.subr.mxu0 %v545
    %676 = vmatpush1.msra.mxu0 %v544
    %677 = vmatprep.subr.mxu0 %v549
    %678 = vmatpush1.msra.mxu0 %v548
    %679 = vmatprep.subr.mxu0 %v553
    %680 = vmatpush1.msra.mxu0 %v552
    %681 = vmatprep.subr.mxu0 %v557
    %682 = vmatpush1.msra.mxu0 %v556
    %683 = vmatprep.subr.mxu0 %v561
    %684 = vmatpush1.msra.mxu0 %v560
    %685 = vmatprep.subr.mxu0 %v565
    %686 = vmatpush1.msra.mxu0 %v564
    %687 = vmatprep.subr.mxu0 %v569
    %688 = vmatpush1.msra.mxu0 %v568
    %689 = vmatprep.subr.mxu0 %v573
    %690 = vmatpush1.msra.mxu0 %v572
    %691 = vmatprep.subr.mxu0 %v577
    %692 = vmatpush1.msra.mxu0 %v576
    %693 = vmatprep.subr.mxu0 %v581
    %694 = vmatpush1.msra.mxu0 %v580
    %695 = vmatprep.subr.mxu0 %v585
    %696 = vmatpush1.msra.mxu0 %v584
    %697 = vmatprep.subr.mxu0 %v589
    %698 = vmatpush1.msra.mxu0 %v588
    %699 = vmatprep.subr.mxu0 %v593
    %700 = vmatpush1.msra.mxu0 %v592
    %701 = vmatprep.subr.mxu0 %v597
    %702 = vmatpush1.msra.mxu0 %v596
    %703 = vmatprep.subr.mxu0 %v601
    %704 = vmatpush1.msra.mxu0 %v600
    %705 = vmatprep.subr.mxu0 0.0
    %706 = vmatpush1.msra.mxu0 0.0
    %707 = vmatprep.subr.mxu0 0.0
    %708 = vmatpush1.msra.mxu0 0.0
    %709 = vmatprep.subr.mxu0 0.0
    %710 = vmatpush1.msra.mxu0 0.0
    %711 = vmatprep.subr.mxu0 0.0
    %712 = vmatpush1.msra.mxu0 0.0
    %713 = vmatprep.subr.mxu0 0.0
    %714 = vmatpush1.msra.mxu0 0.0
    %715 = vmatprep.subr.mxu0 0.0
    %716 = vmatpush1.msra.mxu0 0.0
    %717 = vmatprep.subr.mxu0 0.0
    %718 = vmatpush1.msra.mxu0 0.0
    %719 = vmatprep.subr.mxu0 0.0
    %720 = vmatpush1.msra.mxu0 0.0
    %721 = vmatprep.subr.mxu0 0.0
    %722 = vmatpush1.msra.mxu0 0.0
    %723 = vmatprep.subr.mxu0 0.0
    %724 = vmatpush1.msra.mxu0 0.0
    %725 = vmatprep.subr.mxu0 0.0
    %726 = vmatpush1.msra.mxu0 0.0
    %727 = vmatprep.subr.mxu0 0.0
    %728 = vmatpush1.msra.mxu0 0.0
    %729 = vmatprep.subr.mxu0 0.0
    %730 = vmatpush1.msra.mxu0 0.0
    %731 = vmatprep.subr.mxu0 0.0
    %732 = vmatpush1.msra.mxu0 0.0
    %733 = vmatprep.subr.mxu0 0.0
    %734 = vmatpush1.msra.mxu0 0.0
    %735 = vmatprep.subr.mxu0 0.0
    %736 = vmatpush1.msra.mxu0 0.0
    %737 = vmatprep.mubr.f32.mxu0 0.0
    %738 = vmatmul.mubr.f32.gmra.mrb[0].mxu0 0.0
    %v739 = vpop.f32.mrb[0].mxu0
    %v740 = vadd.f32 0.0, %v739
    %v741 = vpop.f32.mrb[0].mxu0
    %v742 = vadd.f32 0.0, %v741
    %743 = vdwg.mxu0
    %v748 = vcombine.low %v669, %v671
    %v749 = vcombine.low %v740, %v742
    %v751 = vunpack.c.l.s4 1983009808
    %v752 = vunpack.c.0.s8 %v751
    %v753 = vlaneseq
    %v754 = vshrl.u32 %v753, 7
    %v755 = vsub.s32 %v752, %v754
    %v756 = vrot.slane %v748, %v755
    %v758 = vunpack.c.l.s4 1983009808
    %v759 = vunpack.c.0.s8 %v758
    %v760 = vlaneseq
    %v761 = vshrl.u32 %v760, 7
    %v762 = vsub.s32 %v759, %v761
    %v763 = vrot.slane %v749, %v762
    %v764 = vcombine.low %v756, %v763
    %v766 = vadd.f32 %v537, %v764
    %v767 = vxor.u32 %v766, 2147483648
    %v768 = vmul.f32 %v767, 1.442695
    %v769 = vpow.pop %v768
    %v770 = vadd.f32 %v769, 1.0
    %v771 = vrcp.pop %v770
    %v772 = vmul.f32 1.0, %v771
    %v774 = vrot.slane %v766, 6
    %v776 = vtanh.pop %v774
    %v778 = vrot.slane %v772, 2
    %v780 = vmul.f32 %v778, 0.0
    %v781 = vmul.f32 %v772, %v776
    %v782 = vadd.f32 %v780, %v781
    %v783 = vtanh.pop %v782
    %v784 = vrot.slane %v772, 4
    %v786 = vmul.f32 %v784, %v783
    %s787 = scalar_lea.vmem [#allocation2], 8
    %v788 = vld [vmem:[%s787] sm:$0xff]
    %789 = vmatprep.subr.mxu0 %v539
    %790 = vmatpush1.msra.mxu0 %v538
    %791 = vmatprep.subr.mxu0 %v543
    %792 = vmatpush1.msra.mxu0 %v542
    %793 = vmatprep.subr.mxu0 %v547
    %794 = vmatpush1.msra.mxu0 %v546
    %795 = vmatprep.subr.mxu0 %v551
    %796 = vmatpush1.msra.mxu0 %v550
    %797 = vmatprep.subr.mxu0 %v555
    %798 = vmatpush1.msra.mxu0 %v554
    %799 = vmatprep.subr.mxu0 %v559
    %800 = vmatpush1.msra.mxu0 %v558
    %801 = vmatprep.subr.mxu0 %v563
    %802 = vmatpush1.msra.mxu0 %v562
    %803 = vmatprep.subr.mxu0 %v567
    %804 = vmatpush1.msra.mxu0 %v566
    %805 = vmatprep.subr.mxu0 %v571
    %806 = vmatpush1.msra.mxu0 %v570
    %807 = vmatprep.subr.mxu0 %v575
    %808 = vmatpush1.msra.mxu0 %v574
    %809 = vmatprep.subr.mxu0 %v579
    %810 = vmatpush1.msra.mxu0 %v578
    %811 = vmatprep.subr.mxu0 %v583
    %812 = vmatpush1.msra.mxu0 %v582
    %813 = vmatprep.subr.mxu0 %v587
    %814 = vmatpush1.msra.mxu0 %v586
    %815 = vmatprep.subr.mxu0 %v591
    %816 = vmatpush1.msra.mxu0 %v590
    %817 = vmatprep.subr.mxu0 %v595
    %818 = vmatpush1.msra.mxu0 %v594
    %819 = vmatprep.subr.mxu0 %v599
    %820 = vmatpush1.msra.mxu0 %v598
    %821 = vmatprep.subr.mxu0 0.0
    %822 = vmatpush1.msra.mxu0 0.0
    %823 = vmatprep.subr.mxu0 0.0
    %824 = vmatpush1.msra.mxu0 0.0
    %825 = vmatprep.subr.mxu0 0.0
    %826 = vmatpush1.msra.mxu0 0.0
    %827 = vmatprep.subr.mxu0 0.0
    %828 = vmatpush1.msra.mxu0 0.0
    %829 = vmatprep.subr.mxu0 0.0
    %830 = vmatpush1.msra.mxu0 0.0
    %831 = vmatprep.subr.mxu0 0.0
    %832 = vmatpush1.msra.mxu0 0.0
    %833 = vmatprep.subr.mxu0 0.0
    %834 = vmatpush1.msra.mxu0 0.0
    %835 = vmatprep.subr.mxu0 0.0
    %836 = vmatpush1.msra.mxu0 0.0
    %837 = vmatprep.subr.mxu0 0.0
    %838 = vmatpush1.msra.mxu0 0.0
    %839 = vmatprep.subr.mxu0 0.0
    %840 = vmatpush1.msra.mxu0 0.0
    %841 = vmatprep.subr.mxu0 0.0
    %842 = vmatpush1.msra.mxu0 0.0
    %843 = vmatprep.subr.mxu0 0.0
    %844 = vmatpush1.msra.mxu0 0.0
    %845 = vmatprep.subr.mxu0 0.0
    %846 = vmatpush1.msra.mxu0 0.0
    %847 = vmatprep.subr.mxu0 0.0
    %848 = vmatpush1.msra.mxu0 0.0
    %849 = vmatprep.subr.mxu0 0.0
    %850 = vmatpush1.msra.mxu0 0.0
    %851 = vmatprep.subr.mxu0 0.0
    %852 = vmatpush1.msra.mxu0 0.0
    %853 = vmatprep.mubr.f32.mxu0 0.0
    %854 = vmatmul.mubr.f32.gmra.mrb[0].mxu0 %v786
    %v855 = vpop.f32.mrb[0].mxu0
    %v856 = vadd.f32 0.0, %v855
    %v857 = vpop.f32.mrb[0].mxu0
    %v858 = vadd.f32 0.0, %v857
    %859 = vdwg.mxu0
    %860 = vmatprep.subr.mxu0 %v541
    %861 = vmatpush1.msra.mxu0 %v540
    %862 = vmatprep.subr.mxu0 %v545
    %863 = vmatpush1.msra.mxu0 %v544
    %864 = vmatprep.subr.mxu0 %v549
    %865 = vmatpush1.msra.mxu0 %v548
    %866 = vmatprep.subr.mxu0 %v553
    %867 = vmatpush1.msra.mxu0 %v552
    %868 = vmatprep.subr.mxu0 %v557
    %869 = vmatpush1.msra.mxu0 %v556
    %870 = vmatprep.subr.mxu0 %v561
    %871 = vmatpush1.msra.mxu0 %v560
    %872 = vmatprep.subr.mxu0 %v565
    %873 = vmatpush1.msra.mxu0 %v564
    %874 = vmatprep.subr.mxu0 %v569
    %875 = vmatpush1.msra.mxu0 %v568
    %876 = vmatprep.subr.mxu0 %v573
    %877 = vmatpush1.msra.mxu0 %v572
    %878 = vmatprep.subr.mxu0 %v577
    %879 = vmatpush1.msra.mxu0 %v576
    %880 = vmatprep.subr.mxu0 %v581
    %881 = vmatpush1.msra.mxu0 %v580
    %882 = vmatprep.subr.mxu0 %v585
    %883 = vmatpush1.msra.mxu0 %v584
    %884 = vmatprep.subr.mxu0 %v589
    %885 = vmatpush1.msra.mxu0 %v588
    %886 = vmatprep.subr.mxu0 %v593
    %887 = vmatpush1.msra.mxu0 %v592
    %888 = vmatprep.subr.mxu0 %v597
    %889 = vmatpush1.msra.mxu0 %v596
    %890 = vmatprep.subr.mxu0 %v601
    %891 = vmatpush1.msra.mxu0 %v600
    %892 = vmatprep.subr.mxu0 0.0
    %893 = vmatpush1.msra.mxu0 0.0
    %894 = vmatprep.subr.mxu0 0.0
    %895 = vmatpush1.msra.mxu0 0.0
    %896 = vmatprep.subr.mxu0 0.0
    %897 = vmatpush1.msra.mxu0 0.0
    %898 = vmatprep.subr.mxu0 0.0
    %899 = vmatpush1.msra.mxu0 0.0
    %900 = vmatprep.subr.mxu0 0.0
    %901 = vmatpush1.msra.mxu0 0.0
    %902 = vmatprep.subr.mxu0 0.0
    %903 = vmatpush1.msra.mxu0 0.0
    %904 = vmatprep.subr.mxu0 0.0
    %905 = vmatpush1.msra.mxu0 0.0
    %906 = vmatprep.subr.mxu0 0.0
    %907 = vmatpush1.msra.mxu0 0.0
    %908 = vmatprep.subr.mxu0 0.0
    %909 = vmatpush1.msra.mxu0 0.0
    %910 = vmatprep.subr.mxu0 0.0
    %911 = vmatpush1.msra.mxu0 0.0
    %912 = vmatprep.subr.mxu0 0.0
    %913 = vmatpush1.msra.mxu0 0.0
    %914 = vmatprep.subr.mxu0 0.0
    %915 = vmatpush1.msra.mxu0 0.0
    %916 = vmatprep.subr.mxu0 0.0
    %917 = vmatpush1.msra.mxu0 0.0
    %918 = vmatprep.subr.mxu0 0.0
    %919 = vmatpush1.msra.mxu0 0.0
    %920 = vmatprep.subr.mxu0 0.0
    %921 = vmatpush1.msra.mxu0 0.0
    %922 = vmatprep.subr.mxu0 0.0
    %923 = vmatpush1.msra.mxu0 0.0
    %924 = vmatprep.mubr.f32.mxu0 0.0
    %925 = vmatmul.mubr.f32.gmra.mrb[0].mxu0 %v786
    %v926 = vpop.f32.mrb[0].mxu0
    %v927 = vadd.f32 0.0, %v926
    %v928 = vpop.f32.mrb[0].mxu0
    %v929 = vadd.f32 0.0, %v928
    %930 = vdwg.mxu0
    %v935 = vcombine.low %v856, %v858
    %v936 = vcombine.low %v927, %v929
    %v938 = vunpack.c.l.s4 1983009808
    %v939 = vunpack.c.0.s8 %v938
    %v940 = vlaneseq
    %v941 = vshrl.u32 %v940, 7
    %v942 = vsub.s32 %v939, %v941
    %v943 = vrot.slane %v935, %v942
    %v945 = vunpack.c.l.s4 1983009808
    %v946 = vunpack.c.0.s8 %v945
    %v947 = vlaneseq
    %v948 = vshrl.u32 %v947, 7
    %v949 = vsub.s32 %v946, %v948
    %v950 = vrot.slane %v936, %v949
    %v951 = vcombine.low %v943, %v950
    %v953 = vadd.f32 %v788, %v951
    %v954 = vxor.u32 %v953, 2147483648
    %v955 = vmul.f32 %v954, 1.442695
    %v956 = vpow.pop %v955
    %v957 = vadd.f32 %v956, 1.0
    %v958 = vrcp.pop %v957
    %v959 = vmul.f32 1.0, %v958
    %v961 = vrot.slane %v953, 6
    %v963 = vtanh.pop %v961
    %v965 = vrot.slane %v959, 2
    %v967 = vmul.f32 %v965, %v782
    %v968 = vmul.f32 %v959, %v963
    %v969 = vadd.f32 %v967, %v968
    %v970 = vtanh.pop %v969
    %v971 = vrot.slane %v959, 4
    %v973 = vmul.f32 %v971, %v970
    %s974 = scalar_lea.vmem [#allocation2], 16
    %v975 = vld [vmem:[%s974] sm:$0xff]
    %976 = vmatprep.subr.mxu0 %v539
    %977 = vmatpush1.msra.mxu0 %v538
    %978 = vmatprep.subr.mxu0 %v543
    %979 = vmatpush1.msra.mxu0 %v542
    %980 = vmatprep.subr.mxu0 %v547
    %981 = vmatpush1.msra.mxu0 %v546
    %982 = vmatprep.subr.mxu0 %v551
    %983 = vmatpush1.msra.mxu0 %v550
    %984 = vmatprep.subr.mxu0 %v555
    %985 = vmatpush1.msra.mxu0 %v554
    %986 = vmatprep.subr.mxu0 %v559
    %987 = vmatpush1.msra.mxu0 %v558
    %988 = vmatprep.subr.mxu0 %v563
    %989 = vmatpush1.msra.mxu0 %v562
    %990 = vmatprep.subr.mxu0 %v567
    %991 = vmatpush1.msra.mxu0 %v566
    %992 = vmatprep.subr.mxu0 %v571
    %993 = vmatpush1.msra.mxu0 %v570
    %994 = vmatprep.subr.mxu0 %v575
    %995 = vmatpush1.msra.mxu0 %v574
    %996 = vmatprep.subr.mxu0 %v579
    %997 = vmatpush1.msra.mxu0 %v578
    %998 = vmatprep.subr.mxu0 %v583
    %999 = vmatpush1.msra.mxu0 %v582
    %1000 = vmatprep.subr.mxu0 %v587
    %1001 = vmatpush1.msra.mxu0 %v586
    %1002 = vmatprep.subr.mxu0 %v591
    %1003 = vmatpush1.msra.mxu0 %v590
    %1004 = vmatprep.subr.mxu0 %v595
    %1005 = vmatpush1.msra.mxu0 %v594
    %1006 = vmatprep.subr.mxu0 %v599
    %1007 = vmatpush1.msra.mxu0 %v598
    %1008 = vmatprep.subr.mxu0 0.0
    %1009 = vmatpush1.msra.mxu0 0.0
    %1010 = vmatprep.subr.mxu0 0.0
    %1011 = vmatpush1.msra.mxu0 0.0
    %1012 = vmatprep.subr.mxu0 0.0
    %1013 = vmatpush1.msra.mxu0 0.0
    %1014 = vmatprep.subr.mxu0 0.0
    %1015 = vmatpush1.msra.mxu0 0.0
    %1016 = vmatprep.subr.mxu0 0.0
    %1017 = vmatpush1.msra.mxu0 0.0
    %1018 = vmatprep.subr.mxu0 0.0
    %1019 = vmatpush1.msra.mxu0 0.0
    %1020 = vmatprep.subr.mxu0 0.0
    %1021 = vmatpush1.msra.mxu0 0.0
    %1022 = vmatprep.subr.mxu0 0.0
    %1023 = vmatpush1.msra.mxu0 0.0
    %1024 = vmatprep.subr.mxu0 0.0
    %1025 = vmatpush1.msra.mxu0 0.0
    %1026 = vmatprep.subr.mxu0 0.0
    %1027 = vmatpush1.msra.mxu0 0.0
    %1028 = vmatprep.subr.mxu0 0.0
    %1029 = vmatpush1.msra.mxu0 0.0
    %1030 = vmatprep.subr.mxu0 0.0
    %1031 = vmatpush1.msra.mxu0 0.0
    %1032 = vmatprep.subr.mxu0 0.0
    %1033 = vmatpush1.msra.mxu0 0.0
    %1034 = vmatprep.subr.mxu0 0.0
    %1035 = vmatpush1.msra.mxu0 0.0
    %1036 = vmatprep.subr.mxu0 0.0
    %1037 = vmatpush1.msra.mxu0 0.0
    %1038 = vmatprep.subr.mxu0 0.0
    %1039 = vmatpush1.msra.mxu0 0.0
    %1040 = vmatprep.mubr.f32.mxu0 0.0
    %1041 = vmatmul.mubr.f32.gmra.mrb[0].mxu0 %v973
    %v1042 = vpop.f32.mrb[0].mxu0
    %v1043 = vadd.f32 0.0, %v1042
    %v1044 = vpop.f32.mrb[0].mxu0
    %v1045 = vadd.f32 0.0, %v1044
    %1046 = vdwg.mxu0
    %1047 = vmatprep.subr.mxu0 %v541
    %1048 = vmatpush1.msra.mxu0 %v540
    %1049 = vmatprep.subr.mxu0 %v545
    %1050 = vmatpush1.msra.mxu0 %v544
    %1051 = vmatprep.subr.mxu0 %v549
    %1052 = vmatpush1.msra.mxu0 %v548
    %1053 = vmatprep.subr.mxu0 %v553
    %1054 = vmatpush1.msra.mxu0 %v552
    %1055 = vmatprep.subr.mxu0 %v557
    %1056 = vmatpush1.msra.mxu0 %v556
    %1057 = vmatprep.subr.mxu0 %v561
    %1058 = vmatpush1.msra.mxu0 %v560
    %1059 = vmatprep.subr.mxu0 %v565
    %1060 = vmatpush1.msra.mxu0 %v564
    %1061 = vmatprep.subr.mxu0 %v569
    %1062 = vmatpush1.msra.mxu0 %v568
    %1063 = vmatprep.subr.mxu0 %v573
    %1064 = vmatpush1.msra.mxu0 %v572
    %1065 = vmatprep.subr.mxu0 %v577
    %1066 = vmatpush1.msra.mxu0 %v576
    %1067 = vmatprep.subr.mxu0 %v581
    %1068 = vmatpush1.msra.mxu0 %v580
    %1069 = vmatprep.subr.mxu0 %v585
    %1070 = vmatpush1.msra.mxu0 %v584
    %1071 = vmatprep.subr.mxu0 %v589
    %1072 = vmatpush1.msra.mxu0 %v588
    %1073 = vmatprep.subr.mxu0 %v593
    %1074 = vmatpush1.msra.mxu0 %v592
    %1075 = vmatprep.subr.mxu0 %v597
    %1076 = vmatpush1.msra.mxu0 %v596
    %1077 = vmatprep.subr.mxu0 %v601
    %1078 = vmatpush1.msra.mxu0 %v600
    %1079 = vmatprep.subr.mxu0 0.0
    %1080 = vmatpush1.msra.mxu0 0.0
    %1081 = vmatprep.subr.mxu0 0.0
    %1082 = vmatpush1.msra.mxu0 0.0
    %1083 = vmatprep.subr.mxu0 0.0
    %1084 = vmatpush1.msra.mxu0 0.0
    %1085 = vmatprep.subr.mxu0 0.0
    %1086 = vmatpush1.msra.mxu0 0.0
    %1087 = vmatprep.subr.mxu0 0.0
    %1088 = vmatpush1.msra.mxu0 0.0
    %1089 = vmatprep.subr.mxu0 0.0
    %1090 = vmatpush1.msra.mxu0 0.0
    %1091 = vmatprep.subr.mxu0 0.0
    %1092 = vmatpush1.msra.mxu0 0.0
    %1093 = vmatprep.subr.mxu0 0.0
    %1094 = vmatpush1.msra.mxu0 0.0
    %1095 = vmatprep.subr.mxu0 0.0
    %1096 = vmatpush1.msra.mxu0 0.0
    %1097 = vmatprep.subr.mxu0 0.0
    %1098 = vmatpush1.msra.mxu0 0.0
    %1099 = vmatprep.subr.mxu0 0.0
    %1100 = vmatpush1.msra.mxu0 0.0
    %1101 = vmatprep.subr.mxu0 0.0
    %1102 = vmatpush1.msra.mxu0 0.0
    %1103 = vmatprep.subr.mxu0 0.0
    %1104 = vmatpush1.msra.mxu0 0.0
    %1105 = vmatprep.subr.mxu0 0.0
    %1106 = vmatpush1.msra.mxu0 0.0
    %1107 = vmatprep.subr.mxu0 0.0
    %1108 = vmatpush1.msra.mxu0 0.0
    %1109 = vmatprep.subr.mxu0 0.0
    %1110 = vmatpush1.msra.mxu0 0.0
    %1111 = vmatprep.mubr.f32.mxu0 0.0
    %1112 = vmatmul.mubr.f32.gmra.mrb[0].mxu0 %v973
    %v1113 = vpop.f32.mrb[0].mxu0
    %v1114 = vadd.f32 0.0, %v1113
    %v1115 = vpop.f32.mrb[0].mxu0
    %v1116 = vadd.f32 0.0, %v1115
    %1117 = vdwg.mxu0
    %v1122 = vcombine.low %v1043, %v1045
    %v1123 = vcombine.low %v1114, %v1116
    %v1125 = vunpack.c.l.s4 1983009808
    %v1126 = vunpack.c.0.s8 %v1125
    %v1127 = vlaneseq
    %v1128 = vshrl.u32 %v1127, 7
    %v1129 = vsub.s32 %v1126, %v1128
    %v1130 = vrot.slane %v1122, %v1129
    %v1132 = vunpack.c.l.s4 1983009808
    %v1133 = vunpack.c.0.s8 %v1132
    %v1134 = vlaneseq
    %v1135 = vshrl.u32 %v1134, 7
    %v1136 = vsub.s32 %v1133, %v1135
    %v1137 = vrot.slane %v1123, %v1136
    %v1138 = vcombine.low %v1130, %v1137
    %v1140 = vadd.f32 %v975, %v1138
    %v1141 = vxor.u32 %v1140, 2147483648
    %v1142 = vmul.f32 %v1141, 1.442695
    %v1143 = vpow.pop %v1142
    %v1144 = vadd.f32 %v1143, 1.0
    %v1145 = vrcp.pop %v1144
    %v1146 = vmul.f32 1.0, %v1145
    %v1148 = vrot.slane %v1140, 6
    %v1150 = vtanh.pop %v1148
    %v1152 = vrot.slane %v1146, 2
    %v1154 = vmul.f32 %v1152, %v969
    %v1155 = vmul.f32 %v1146, %v1150
    %v1156 = vadd.f32 %v1154, %v1155
    %v1157 = vtanh.pop %v1156
    %v1158 = vrot.slane %v1146, 4
    %v1160 = vmul.f32 %v1158, %v1157
    %s1161 = scalar_lea.vmem [#allocation2], 24
    %v1162 = vld [vmem:[%s1161] sm:$0xff]
    %1163 = vmatprep.subr.mxu0 %v539
    %1164 = vmatpush1.msra.mxu0 %v538
    %1165 = vmatprep.subr.mxu0 %v543
    %1166 = vmatpush1.msra.mxu0 %v542
    %1167 = vmatprep.subr.mxu0 %v547
    %1168 = vmatpush1.msra.mxu0 %v546
    %1169 = vmatprep.subr.mxu0 %v551
    %1170 = vmatpush1.msra.mxu0 %v550
    %1171 = vmatprep.subr.mxu0 %v555
    %1172 = vmatpush1.msra.mxu0 %v554
    %1173 = vmatprep.subr.mxu0 %v559
    %1174 = vmatpush1.msra.mxu0 %v558
    %1175 = vmatprep.subr.mxu0 %v563
    %1176 = vmatpush1.msra.mxu0 %v562
    %1177 = vmatprep.subr.mxu0 %v567
    %1178 = vmatpush1.msra.mxu0 %v566
    %1179 = vmatprep.subr.mxu0 %v571
    %1180 = vmatpush1.msra.mxu0 %v570
    %1181 = vmatprep.subr.mxu0 %v575
    %1182 = vmatpush1.msra.mxu0 %v574
    %1183 = vmatprep.subr.mxu0 %v579
    %1184 = vmatpush1.msra.mxu0 %v578
    %1185 = vmatprep.subr.mxu0 %v583
    %1186 = vmatpush1.msra.mxu0 %v582
    %1187 = vmatprep.subr.mxu0 %v587
    %1188 = vmatpush1.msra.mxu0 %v586
    %1189 = vmatprep.subr.mxu0 %v591
    %1190 = vmatpush1.msra.mxu0 %v590
    %1191 = vmatprep.subr.mxu0 %v595
    %1192 = vmatpush1.msra.mxu0 %v594
    %1193 = vmatprep.subr.mxu0 %v599
    %1194 = vmatpush1.msra.mxu0 %v598
    %1195 = vmatprep.subr.mxu0 0.0
    %1196 = vmatpush1.msra.mxu0 0.0
    %1197 = vmatprep.subr.mxu0 0.0
    %1198 = vmatpush1.msra.mxu0 0.0
    %1199 = vmatprep.subr.mxu0 0.0
    %1200 = vmatpush1.msra.mxu0 0.0
    %1201 = vmatprep.subr.mxu0 0.0
    %1202 = vmatpush1.msra.mxu0 0.0
    %1203 = vmatprep.subr.mxu0 0.0
    %1204 = vmatpush1.msra.mxu0 0.0
    %1205 = vmatprep.subr.mxu0 0.0
    %1206 = vmatpush1.msra.mxu0 0.0
    %1207 = vmatprep.subr.mxu0 0.0
    %1208 = vmatpush1.msra.mxu0 0.0
    %1209 = vmatprep.subr.mxu0 0.0
    %1210 = vmatpush1.msra.mxu0 0.0
    %1211 = vmatprep.subr.mxu0 0.0
    %1212 = vmatpush1.msra.mxu0 0.0
    %1213 = vmatprep.subr.mxu0 0.0
    %1214 = vmatpush1.msra.mxu0 0.0
    %1215 = vmatprep.subr.mxu0 0.0
    %1216 = vmatpush1.msra.mxu0 0.0
    %1217 = vmatprep.subr.mxu0 0.0
    %1218 = vmatpush1.msra.mxu0 0.0
    %1219 = vmatprep.subr.mxu0 0.0
    %1220 = vmatpush1.msra.mxu0 0.0
    %1221 = vmatprep.subr.mxu0 0.0
    %1222 = vmatpush1.msra.mxu0 0.0
    %1223 = vmatprep.subr.mxu0 0.0
    %1224 = vmatpush1.msra.mxu0 0.0
    %1225 = vmatprep.subr.mxu0 0.0
    %1226 = vmatpush1.msra.mxu0 0.0
    %1227 = vmatprep.mubr.f32.mxu0 0.0
    %1228 = vmatmul.mubr.f32.gmra.mrb[0].mxu0 %v1160
    %v1229 = vpop.f32.mrb[0].mxu0
    %v1230 = vadd.f32 0.0, %v1229
    %v1231 = vpop.f32.mrb[0].mxu0
    %v1232 = vadd.f32 0.0, %v1231
    %1233 = vdwg.mxu0
    %1234 = vmatprep.subr.mxu0 %v541
    %1235 = vmatpush1.msra.mxu0 %v540
    %1236 = vmatprep.subr.mxu0 %v545
    %1237 = vmatpush1.msra.mxu0 %v544
    %1238 = vmatprep.subr.mxu0 %v549
    %1239 = vmatpush1.msra.mxu0 %v548
    %1240 = vmatprep.subr.mxu0 %v553
    %1241 = vmatpush1.msra.mxu0 %v552
    %1242 = vmatprep.subr.mxu0 %v557
    %1243 = vmatpush1.msra.mxu0 %v556
    %1244 = vmatprep.subr.mxu0 %v561
    %1245 = vmatpush1.msra.mxu0 %v560
    %1246 = vmatprep.subr.mxu0 %v565
    %1247 = vmatpush1.msra.mxu0 %v564
    %1248 = vmatprep.subr.mxu0 %v569
    %1249 = vmatpush1.msra.mxu0 %v568
    %1250 = vmatprep.subr.mxu0 %v573
    %1251 = vmatpush1.msra.mxu0 %v572
    %1252 = vmatprep.subr.mxu0 %v577
    %1253 = vmatpush1.msra.mxu0 %v576
    %1254 = vmatprep.subr.mxu0 %v581
    %1255 = vmatpush1.msra.mxu0 %v580
    %1256 = vmatprep.subr.mxu0 %v585
    %1257 = vmatpush1.msra.mxu0 %v584
    %1258 = vmatprep.subr.mxu0 %v589
    %1259 = vmatpush1.msra.mxu0 %v588
    %1260 = vmatprep.subr.mxu0 %v593
    %1261 = vmatpush1.msra.mxu0 %v592
    %1262 = vmatprep.subr.mxu0 %v597
    %1263 = vmatpush1.msra.mxu0 %v596
    %1264 = vmatprep.subr.mxu0 %v601
    %1265 = vmatpush1.msra.mxu0 %v600
    %1266 = vmatprep.subr.mxu0 0.0
    %1267 = vmatpush1.msra.mxu0 0.0
    %1268 = vmatprep.subr.mxu0 0.0
    %1269 = vmatpush1.msra.mxu0 0.0
    %1270 = vmatprep.subr.mxu0 0.0
    %1271 = vmatpush1.msra.mxu0 0.0
    %1272 = vmatprep.subr.mxu0 0.0
    %1273 = vmatpush1.msra.mxu0 0.0
    %1274 = vmatprep.subr.mxu0 0.0
    %1275 = vmatpush1.msra.mxu0 0.0
    %1276 = vmatprep.subr.mxu0 0.0
    %1277 = vmatpush1.msra.mxu0 0.0
    %1278 = vmatprep.subr.mxu0 0.0
    %1279 = vmatpush1.msra.mxu0 0.0
    %1280 = vmatprep.subr.mxu0 0.0
    %1281 = vmatpush1.msra.mxu0 0.0
    %1282 = vmatprep.subr.mxu0 0.0
    %1283 = vmatpush1.msra.mxu0 0.0
    %1284 = vmatprep.subr.mxu0 0.0
    %1285 = vmatpush1.msra.mxu0 0.0
    %1286 = vmatprep.subr.mxu0 0.0
    %1287 = vmatpush1.msra.mxu0 0.0
    %1288 = vmatprep.subr.mxu0 0.0
    %1289 = vmatpush1.msra.mxu0 0.0
    %1290 = vmatprep.subr.mxu0 0.0
    %1291 = vmatpush1.msra.mxu0 0.0
    %1292 = vmatprep.subr.mxu0 0.0
    %1293 = vmatpush1.msra.mxu0 0.0
    %1294 = vmatprep.subr.mxu0 0.0
    %1295 = vmatpush1.msra.mxu0 0.0
    %1296 = vmatprep.subr.mxu0 0.0
    %1297 = vmatpush1.msra.mxu0 0.0
    %1298 = vmatprep.mubr.f32.mxu0 0.0
    %1299 = vmatmul.mubr.f32.gmra.mrb[0].mxu0 %v1160
    %v1300 = vpop.f32.mrb[0].mxu0
    %v1301 = vadd.f32 0.0, %v1300
    %v1302 = vpop.f32.mrb[0].mxu0
    %v1303 = vadd.f32 0.0, %v1302
    %1304 = vdwg.mxu0
    %v1309 = vcombine.low %v1230, %v1232
    %v1310 = vcombine.low %v1301, %v1303
    %v1312 = vunpack.c.l.s4 1983009808
    %v1313 = vunpack.c.0.s8 %v1312
    %v1314 = vlaneseq
    %v1315 = vshrl.u32 %v1314, 7
    %v1316 = vsub.s32 %v1313, %v1315
    %v1317 = vrot.slane %v1309, %v1316
    %v1319 = vunpack.c.l.s4 1983009808
    %v1320 = vunpack.c.0.s8 %v1319
    %v1321 = vlaneseq
    %v1322 = vshrl.u32 %v1321, 7
    %v1323 = vsub.s32 %v1320, %v1322
    %v1324 = vrot.slane %v1310, %v1323
    %v1325 = vcombine.low %v1317, %v1324
    %v1327 = vadd.f32 %v1162, %v1325
    %v1328 = vxor.u32 %v1327, 2147483648
    %v1329 = vmul.f32 %v1328, 1.442695
    %v1330 = vpow.pop %v1329
    %v1331 = vadd.f32 %v1330, 1.0
    %v1332 = vrcp.pop %v1331
    %v1333 = vmul.f32 1.0, %v1332
    %v1335 = vrot.slane %v1327, 6
    %v1337 = vtanh.pop %v1335
    %v1339 = vrot.slane %v1333, 2
    %v1341 = vmul.f32 %v1339, %v1156
    %v1342 = vmul.f32 %v1333, %v1337
    %v1343 = vadd.f32 %v1341, %v1342
    %v1344 = vtanh.pop %v1343
    %v1345 = vrot.slane %v1333, 4
    %v1347 = vmul.f32 %v1345, %v1344
    %s1348 = scalar_lea.vmem [#allocation2], 32
    %v1349 = vld [vmem:[%s1348] sm:$0xff]
    %1350 = vmatprep.subr.mxu0 %v539
    %1351 = vmatpush1.msra.mxu0 %v538
    %1352 = vmatprep.subr.mxu0 %v543
    %1353 = vmatpush1.msra.mxu0 %v542
    %1354 = vmatprep.subr.mxu0 %v547
    %1355 = vmatpush1.msra.mxu0 %v546
    %1356 = vmatprep.subr.mxu0 %v551
    %1357 = vmatpush1.msra.mxu0 %v550
    %1358 = vmatprep.subr.mxu0 %v555
    %1359 = vmatpush1.msra.mxu0 %v554
    %1360 = vmatprep.subr.mxu0 %v559
    %1361 = vmatpush1.msra.mxu0 %v558
    %1362 = vmatprep.subr.mxu0 %v563
    %1363 = vmatpush1.msra.mxu0 %v562
    %1364 = vmatprep.subr.mxu0 %v567
    %1365 = vmatpush1.msra.mxu0 %v566
    %1366 = vmatprep.subr.mxu0 %v571
    %1367 = vmatpush1.msra.mxu0 %v570
    %1368 = vmatprep.subr.mxu0 %v575
    %1369 = vmatpush1.msra.mxu0 %v574
    %1370 = vmatprep.subr.mxu0 %v579
    %1371 = vmatpush1.msra.mxu0 %v578
    %1372 = vmatprep.subr.mxu0 %v583
    %1373 = vmatpush1.msra.mxu0 %v582
    %1374 = vmatprep.subr.mxu0 %v587
    %1375 = vmatpush1.msra.mxu0 %v586
    %1376 = vmatprep.subr.mxu0 %v591
    %1377 = vmatpush1.msra.mxu0 %v590
    %1378 = vmatprep.subr.mxu0 %v595
    %1379 = vmatpush1.msra.mxu0 %v594
    %1380 = vmatprep.subr.mxu0 %v599
    %1381 = vmatpush1.msra.mxu0 %v598
    %1382 = vmatprep.subr.mxu0 0.0
    %1383 = vmatpush1.msra.mxu0 0.0
    %1384 = vmatprep.subr.mxu0 0.0
    %1385 = vmatpush1.msra.mxu0 0.0
    %1386 = vmatprep.subr.mxu0 0.0
    %1387 = vmatpush1.msra.mxu0 0.0
    %1388 = vmatprep.subr.mxu0 0.0
    %1389 = vmatpush1.msra.mxu0 0.0
    %1390 = vmatprep.subr.mxu0 0.0
    %1391 = vmatpush1.msra.mxu0 0.0
    %1392 = vmatprep.subr.mxu0 0.0
    %1393 = vmatpush1.msra.mxu0 0.0
    %1394 = vmatprep.subr.mxu0 0.0
    %1395 = vmatpush1.msra.mxu0 0.0
    %1396 = vmatprep.subr.mxu0 0.0
    %1397 = vmatpush1.msra.mxu0 0.0
    %1398 = vmatprep.subr.mxu0 0.0
    %1399 = vmatpush1.msra.mxu0 0.0
    %1400 = vmatprep.subr.mxu0 0.0
    %1401 = vmatpush1.msra.mxu0 0.0
    %1402 = vmatprep.subr.mxu0 0.0
    %1403 = vmatpush1.msra.mxu0 0.0
    %1404 = vmatprep.subr.mxu0 0.0
    %1405 = vmatpush1.msra.mxu0 0.0
    %1406 = vmatprep.subr.mxu0 0.0
    %1407 = vmatpush1.msra.mxu0 0.0
    %1408 = vmatprep.subr.mxu0 0.0
    %1409 = vmatpush1.msra.mxu0 0.0
    %1410 = vmatprep.subr.mxu0 0.0
    %1411 = vmatpush1.msra.mxu0 0.0
    %1412 = vmatprep.subr.mxu0 0.0
    %1413 = vmatpush1.msra.mxu0 0.0
    %1414 = vmatprep.mubr.f32.mxu0 0.0
    %1415 = vmatmul.mubr.f32.gmra.mrb[0].mxu0 %v1347
    %v1416 = vpop.f32.mrb[0].mxu0
    %v1417 = vadd.f32 0.0, %v1416
    %v1418 = vpop.f32.mrb[0].mxu0
    %v1419 = vadd.f32 0.0, %v1418
    %1420 = vdwg.mxu0
    %1421 = vmatprep.subr.mxu0 %v541
    %1422 = vmatpush1.msra.mxu0 %v540
    %1423 = vmatprep.subr.mxu0 %v545
    %1424 = vmatpush1.msra.mxu0 %v544
    %1425 = vmatprep.subr.mxu0 %v549
    %1426 = vmatpush1.msra.mxu0 %v548
    %1427 = vmatprep.subr.mxu0 %v553
    %1428 = vmatpush1.msra.mxu0 %v552
    %1429 = vmatprep.subr.mxu0 %v557
    %1430 = vmatpush1.msra.mxu0 %v556
    %1431 = vmatprep.subr.mxu0 %v561
    %1432 = vmatpush1.msra.mxu0 %v560
    %1433 = vmatprep.subr.mxu0 %v565
    %1434 = vmatpush1.msra.mxu0 %v564
    %1435 = vmatprep.subr.mxu0 %v569
    %1436 = vmatpush1.msra.mxu0 %v568
    %1437 = vmatprep.subr.mxu0 %v573
    %1438 = vmatpush1.msra.mxu0 %v572
    %1439 = vmatprep.subr.mxu0 %v577
    %1440 = vmatpush1.msra.mxu0 %v576
    %1441 = vmatprep.subr.mxu0 %v581
    %1442 = vmatpush1.msra.mxu0 %v580
    %1443 = vmatprep.subr.mxu0 %v585
    %1444 = vmatpush1.msra.mxu0 %v584
    %1445 = vmatprep.subr.mxu0 %v589
    %1446 = vmatpush1.msra.mxu0 %v588
    %1447 = vmatprep.subr.mxu0 %v593
    %1448 = vmatpush1.msra.mxu0 %v592
    %1449 = vmatprep.subr.mxu0 %v597
    %1450 = vmatpush1.msra.mxu0 %v596
    %1451 = vmatprep.subr.mxu0 %v601
    %1452 = vmatpush1.msra.mxu0 %v600
    %1453 = vmatprep.subr.mxu0 0.0
    %1454 = vmatpush1.msra.mxu0 0.0
    %1455 = vmatprep.subr.mxu0 0.0
    %1456 = vmatpush1.msra.mxu0 0.0
    %1457 = vmatprep.subr.mxu0 0.0
    %1458 = vmatpush1.msra.mxu0 0.0
    %1459 = vmatprep.subr.mxu0 0.0
    %1460 = vmatpush1.msra.mxu0 0.0
    %1461 = vmatprep.subr.mxu0 0.0
    %1462 = vmatpush1.msra.mxu0 0.0
    %1463 = vmatprep.subr.mxu0 0.0
    %1464 = vmatpush1.msra.mxu0 0.0
    %1465 = vmatprep.subr.mxu0 0.0
    %1466 = vmatpush1.msra.mxu0 0.0
    %1467 = vmatprep.subr.mxu0 0.0
    %1468 = vmatpush1.msra.mxu0 0.0
    %1469 = vmatprep.subr.mxu0 0.0
    %1470 = vmatpush1.msra.mxu0 0.0
    %1471 = vmatprep.subr.mxu0 0.0
    %1472 = vmatpush1.msra.mxu0 0.0
    %1473 = vmatprep.subr.mxu0 0.0
    %1474 = vmatpush1.msra.mxu0 0.0
    %1475 = vmatprep.subr.mxu0 0.0
    %1476 = vmatpush1.msra.mxu0 0.0
    %1477 = vmatprep.subr.mxu0 0.0
    %1478 = vmatpush1.msra.mxu0 0.0
    %1479 = vmatprep.subr.mxu0 0.0
    %1480 = vmatpush1.msra.mxu0 0.0
    %1481 = vmatprep.subr.mxu0 0.0
    %1482 = vmatpush1.msra.mxu0 0.0
    %1483 = vmatprep.subr.mxu0 0.0
    %1484 = vmatpush1.msra.mxu0 0.0
    %1485 = vmatprep.mubr.f32.mxu0 0.0
    %1486 = vmatmul.mubr.f32.gmra.mrb[0].mxu0 %v1347
    %v1487 = vpop.f32.mrb[0].mxu0
    %v1488 = vadd.f32 0.0, %v1487
    %v1489 = vpop.f32.mrb[0].mxu0
    %v1490 = vadd.f32 0.0, %v1489
    %1491 = vdwg.mxu0
    %v1496 = vcombine.low %v1417, %v1419
    %v1497 = vcombine.low %v1488, %v1490
    %v1499 = vunpack.c.l.s4 1983009808
    %v1500 = vunpack.c.0.s8 %v1499
    %v1501 = vlaneseq
    %v1502 = vshrl.u32 %v1501, 7
    %v1503 = vsub.s32 %v1500, %v1502
    %v1504 = vrot.slane %v1496, %v1503
    %v1506 = vunpack.c.l.s4 1983009808
    %v1507 = vunpack.c.0.s8 %v1506
    %v1508 = vlaneseq
    %v1509 = vshrl.u32 %v1508, 7
    %v1510 = vsub.s32 %v1507, %v1509
    %v1511 = vrot.slane %v1497, %v1510
    %v1512 = vcombine.low %v1504, %v1511
    %v1514 = vadd.f32 %v1349, %v1512
    %v1515 = vxor.u32 %v1514, 2147483648
    %v1516 = vmul.f32 %v1515, 1.442695
    %v1517 = vpow.pop %v1516
    %v1518 = vadd.f32 %v1517, 1.0
    %v1519 = vrcp.pop %v1518
    %v1520 = vmul.f32 1.0, %v1519
    %v1522 = vrot.slane %v1514, 6
    %v1524 = vtanh.pop %v1522
    %v1526 = vrot.slane %v1520, 2
    %v1528 = vmul.f32 %v1526, %v1343
    %v1529 = vmul.f32 %v1520, %v1524
    %v1530 = vadd.f32 %v1528, %v1529
    %v1531 = vtanh.pop %v1530
    %v1532 = vrot.slane %v1520, 4
    %v1534 = vmul.f32 %v1532, %v1531
    %s1535 = scalar_lea.vmem [#allocation2], 40
    %v1536 = vld [vmem:[%s1535] sm:$0xff]
    %1537 = vmatprep.subr.mxu0 %v539
    %1538 = vmatpush1.msra.mxu0 %v538
    %1539 = vmatprep.subr.mxu0 %v543
    %1540 = vmatpush1.msra.mxu0 %v542
    %1541 = vmatprep.subr.mxu0 %v547
    %1542 = vmatpush1.msra.mxu0 %v546
    %1543 = vmatprep.subr.mxu0 %v551
    %1544 = vmatpush1.msra.mxu0 %v550
    %1545 = vmatprep.subr.mxu0 %v555
    %1546 = vmatpush1.msra.mxu0 %v554
    %1547 = vmatprep.subr.mxu0 %v559
    %1548 = vmatpush1.msra.mxu0 %v558
    %1549 = vmatprep.subr.mxu0 %v563
    %1550 = vmatpush1.msra.mxu0 %v562
    %1551 = vmatprep.subr.mxu0 %v567
    %1552 = vmatpush1.msra.mxu0 %v566
    %1553 = vmatprep.subr.mxu0 %v571
    %1554 = vmatpush1.msra.mxu0 %v570
    %1555 = vmatprep.subr.mxu0 %v575
    %1556 = vmatpush1.msra.mxu0 %v574
    %1557 = vmatprep.subr.mxu0 %v579
    %1558 = vmatpush1.msra.mxu0 %v578
    %1559 = vmatprep.subr.mxu0 %v583
    %1560 = vmatpush1.msra.mxu0 %v582
    %1561 = vmatprep.subr.mxu0 %v587
    %1562 = vmatpush1.msra.mxu0 %v586
    %1563 = vmatprep.subr.mxu0 %v591
    %1564 = vmatpush1.msra.mxu0 %v590
    %1565 = vmatprep.subr.mxu0 %v595
    %1566 = vmatpush1.msra.mxu0 %v594
    %1567 = vmatprep.subr.mxu0 %v599
    %1568 = vmatpush1.msra.mxu0 %v598
    %1569 = vmatprep.subr.mxu0 0.0
    %1570 = vmatpush1.msra.mxu0 0.0
    %1571 = vmatprep.subr.mxu0 0.0
    %1572 = vmatpush1.msra.mxu0 0.0
    %1573 = vmatprep.subr.mxu0 0.0
    %1574 = vmatpush1.msra.mxu0 0.0
    %1575 = vmatprep.subr.mxu0 0.0
    %1576 = vmatpush1.msra.mxu0 0.0
    %1577 = vmatprep.subr.mxu0 0.0
    %1578 = vmatpush1.msra.mxu0 0.0
    %1579 = vmatprep.subr.mxu0 0.0
    %1580 = vmatpush1.msra.mxu0 0.0
    %1581 = vmatprep.subr.mxu0 0.0
    %1582 = vmatpush1.msra.mxu0 0.0
    %1583 = vmatprep.subr.mxu0 0.0
    %1584 = vmatpush1.msra.mxu0 0.0
    %1585 = vmatprep.subr.mxu0 0.0
    %1586 = vmatpush1.msra.mxu0 0.0
    %1587 = vmatprep.subr.mxu0 0.0
    %1588 = vmatpush1.msra.mxu0 0.0
    %1589 = vmatprep.subr.mxu0 0.0
    %1590 = vmatpush1.msra.mxu0 0.0
    %1591 = vmatprep.subr.mxu0 0.0
    %1592 = vmatpush1.msra.mxu0 0.0
    %1593 = vmatprep.subr.mxu0 0.0
    %1594 = vmatpush1.msra.mxu0 0.0
    %1595 = vmatprep.subr.mxu0 0.0
    %1596 = vmatpush1.msra.mxu0 0.0
    %1597 = vmatprep.subr.mxu0 0.0
    %1598 = vmatpush1.msra.mxu0 0.0
    %1599 = vmatprep.subr.mxu0 0.0
    %1600 = vmatpush1.msra.mxu0 0.0
    %1601 = vmatprep.mubr.f32.mxu0 0.0
    %1602 = vmatmul.mubr.f32.gmra.mrb[0].mxu0 %v1534
    %v1603 = vpop.f32.mrb[0].mxu0
    %v1604 = vadd.f32 0.0, %v1603
    %v1605 = vpop.f32.mrb[0].mxu0
    %v1606 = vadd.f32 0.0, %v1605
    %1607 = vdwg.mxu0
    %1608 = vmatprep.subr.mxu0 %v541
    %1609 = vmatpush1.msra.mxu0 %v540
    %1610 = vmatprep.subr.mxu0 %v545
    %1611 = vmatpush1.msra.mxu0 %v544
    %1612 = vmatprep.subr.mxu0 %v549
    %1613 = vmatpush1.msra.mxu0 %v548
    %1614 = vmatprep.subr.mxu0 %v553
    %1615 = vmatpush1.msra.mxu0 %v552
    %1616 = vmatprep.subr.mxu0 %v557
    %1617 = vmatpush1.msra.mxu0 %v556
    %1618 = vmatprep.subr.mxu0 %v561
    %1619 = vmatpush1.msra.mxu0 %v560
    %1620 = vmatprep.subr.mxu0 %v565
    %1621 = vmatpush1.msra.mxu0 %v564
    %1622 = vmatprep.subr.mxu0 %v569
    %1623 = vmatpush1.msra.mxu0 %v568
    %1624 = vmatprep.subr.mxu0 %v573
    %1625 = vmatpush1.msra.mxu0 %v572
    %1626 = vmatprep.subr.mxu0 %v577
    %1627 = vmatpush1.msra.mxu0 %v576
    %1628 = vmatprep.subr.mxu0 %v581
    %1629 = vmatpush1.msra.mxu0 %v580
    %1630 = vmatprep.subr.mxu0 %v585
    %1631 = vmatpush1.msra.mxu0 %v584
    %1632 = vmatprep.subr.mxu0 %v589
    %1633 = vmatpush1.msra.mxu0 %v588
    %1634 = vmatprep.subr.mxu0 %v593
    %1635 = vmatpush1.msra.mxu0 %v592
    %1636 = vmatprep.subr.mxu0 %v597
    %1637 = vmatpush1.msra.mxu0 %v596
    %1638 = vmatprep.subr.mxu0 %v601
    %1639 = vmatpush1.msra.mxu0 %v600
    %1640 = vmatprep.subr.mxu0 0.0
    %1641 = vmatpush1.msra.mxu0 0.0
    %1642 = vmatprep.subr.mxu0 0.0
    %1643 = vmatpush1.msra.mxu0 0.0
    %1644 = vmatprep.subr.mxu0 0.0
    %1645 = vmatpush1.msra.mxu0 0.0
    %1646 = vmatprep.subr.mxu0 0.0
    %1647 = vmatpush1.msra.mxu0 0.0
    %1648 = vmatprep.subr.mxu0 0.0
    %1649 = vmatpush1.msra.mxu0 0.0
    %1650 = vmatprep.subr.mxu0 0.0
    %1651 = vmatpush1.msra.mxu0 0.0
    %1652 = vmatprep.subr.mxu0 0.0
    %1653 = vmatpush1.msra.mxu0 0.0
    %1654 = vmatprep.subr.mxu0 0.0
    %1655 = vmatpush1.msra.mxu0 0.0
    %1656 = vmatprep.subr.mxu0 0.0
    %1657 = vmatpush1.msra.mxu0 0.0
    %1658 = vmatprep.subr.mxu0 0.0
    %1659 = vmatpush1.msra.mxu0 0.0
    %1660 = vmatprep.subr.mxu0 0.0
    %1661 = vmatpush1.msra.mxu0 0.0
    %1662 = vmatprep.subr.mxu0 0.0
    %1663 = vmatpush1.msra.mxu0 0.0
    %1664 = vmatprep.subr.mxu0 0.0
    %1665 = vmatpush1.msra.mxu0 0.0
    %1666 = vmatprep.subr.mxu0 0.0
    %1667 = vmatpush1.msra.mxu0 0.0
    %1668 = vmatprep.subr.mxu0 0.0
    %1669 = vmatpush1.msra.mxu0 0.0
    %1670 = vmatprep.subr.mxu0 0.0
    %1671 = vmatpush1.msra.mxu0 0.0
    %1672 = vmatprep.mubr.f32.mxu0 0.0
    %1673 = vmatmul.mubr.f32.gmra.mrb[0].mxu0 %v1534
    %v1674 = vpop.f32.mrb[0].mxu0
    %v1675 = vadd.f32 0.0, %v1674
    %v1676 = vpop.f32.mrb[0].mxu0
    %v1677 = vadd.f32 0.0, %v1676
    %1678 = vdwg.mxu0
    %v1683 = vcombine.low %v1604, %v1606
    %v1684 = vcombine.low %v1675, %v1677
    %v1686 = vunpack.c.l.s4 1983009808
    %v1687 = vunpack.c.0.s8 %v1686
    %v1688 = vlaneseq
    %v1689 = vshrl.u32 %v1688, 7
    %v1690 = vsub.s32 %v1687, %v1689
    %v1691 = vrot.slane %v1683, %v1690
    %v1693 = vunpack.c.l.s4 1983009808
    %v1694 = vunpack.c.0.s8 %v1693
    %v1695 = vlaneseq
    %v1696 = vshrl.u32 %v1695, 7
    %v1697 = vsub.s32 %v1694, %v1696
    %v1698 = vrot.slane %v1684, %v1697
    %v1699 = vcombine.low %v1691, %v1698
    %v1701 = vadd.f32 %v1536, %v1699
    %v1702 = vxor.u32 %v1701, 2147483648
    %v1703 = vmul.f32 %v1702, 1.442695
    %v1704 = vpow.pop %v1703
    %v1705 = vadd.f32 %v1704, 1.0
    %v1706 = vrcp.pop %v1705
    %v1707 = vmul.f32 1.0, %v1706
    %v1709 = vrot.slane %v1701, 6
    %v1711 = vtanh.pop %v1709
    %v1713 = vrot.slane %v1707, 2
    %v1715 = vmul.f32 %v1713, %v1530
    %v1716 = vmul.f32 %v1707, %v1711
    %v1717 = vadd.f32 %v1715, %v1716
    %v1718 = vtanh.pop %v1717
    %v1719 = vrot.slane %v1707, 4
    %v1721 = vmul.f32 %v1719, %v1718
    %s1722 = scalar_lea.vmem [#allocation2], 48
    %v1723 = vld [vmem:[%s1722] sm:$0xff]
    %1724 = vmatprep.subr.mxu0 %v539
    %1725 = vmatpush1.msra.mxu0 %v538
    %1726 = vmatprep.subr.mxu0 %v543
    %1727 = vmatpush1.msra.mxu0 %v542
    %1728 = vmatprep.subr.mxu0 %v547
    %1729 = vmatpush1.msra.mxu0 %v546
    %1730 = vmatprep.subr.mxu0 %v551
    %1731 = vmatpush1.msra.mxu0 %v550
    %1732 = vmatprep.subr.mxu0 %v555
    %1733 = vmatpush1.msra.mxu0 %v554
    %1734 = vmatprep.subr.mxu0 %v559
    %1735 = vmatpush1.msra.mxu0 %v558
    %1736 = vmatprep.subr.mxu0 %v563
    %1737 = vmatpush1.msra.mxu0 %v562
    %1738 = vmatprep.subr.mxu0 %v567
    %1739 = vmatpush1.msra.mxu0 %v566
    %1740 = vmatprep.subr.mxu0 %v571
    %1741 = vmatpush1.msra.mxu0 %v570
    %1742 = vmatprep.subr.mxu0 %v575
    %1743 = vmatpush1.msra.mxu0 %v574
    %1744 = vmatprep.subr.mxu0 %v579
    %1745 = vmatpush1.msra.mxu0 %v578
    %1746 = vmatprep.subr.mxu0 %v583
    %1747 = vmatpush1.msra.mxu0 %v582
    %1748 = vmatprep.subr.mxu0 %v587
    %1749 = vmatpush1.msra.mxu0 %v586
    %1750 = vmatprep.subr.mxu0 %v591
    %1751 = vmatpush1.msra.mxu0 %v590
    %1752 = vmatprep.subr.mxu0 %v595
    %1753 = vmatpush1.msra.mxu0 %v594
    %1754 = vmatprep.subr.mxu0 %v599
    %1755 = vmatpush1.msra.mxu0 %v598
    %1756 = vmatprep.subr.mxu0 0.0
    %1757 = vmatpush1.msra.mxu0 0.0
    %1758 = vmatprep.subr.mxu0 0.0
    %1759 = vmatpush1.msra.mxu0 0.0
    %1760 = vmatprep.subr.mxu0 0.0
    %1761 = vmatpush1.msra.mxu0 0.0
    %1762 = vmatprep.subr.mxu0 0.0
    %1763 = vmatpush1.msra.mxu0 0.0
    %1764 = vmatprep.subr.mxu0 0.0
    %1765 = vmatpush1.msra.mxu0 0.0
    %1766 = vmatprep.subr.mxu0 0.0
    %1767 = vmatpush1.msra.mxu0 0.0
    %1768 = vmatprep.subr.mxu0 0.0
    %1769 = vmatpush1.msra.mxu0 0.0
    %1770 = vmatprep.subr.mxu0 0.0
    %1771 = vmatpush1.msra.mxu0 0.0
    %1772 = vmatprep.subr.mxu0 0.0
    %1773 = vmatpush1.msra.mxu0 0.0
    %1774 = vmatprep.subr.mxu0 0.0
    %1775 = vmatpush1.msra.mxu0 0.0
    %1776 = vmatprep.subr.mxu0 0.0
    %1777 = vmatpush1.msra.mxu0 0.0
    %1778 = vmatprep.subr.mxu0 0.0
    %1779 = vmatpush1.msra.mxu0 0.0
    %1780 = vmatprep.subr.mxu0 0.0
    %1781 = vmatpush1.msra.mxu0 0.0
    %1782 = vmatprep.subr.mxu0 0.0
    %1783 = vmatpush1.msra.mxu0 0.0
    %1784 = vmatprep.subr.mxu0 0.0
    %1785 = vmatpush1.msra.mxu0 0.0
    %1786 = vmatprep.subr.mxu0 0.0
    %1787 = vmatpush1.msra.mxu0 0.0
    %1788 = vmatprep.mubr.f32.mxu0 0.0
    %1789 = vmatmul.mubr.f32.gmra.mrb[0].mxu0 %v1721
    %v1790 = vpop.f32.mrb[0].mxu0
    %v1791 = vadd.f32 0.0, %v1790
    %v1792 = vpop.f32.mrb[0].mxu0
    %v1793 = vadd.f32 0.0, %v1792
    %1794 = vdwg.mxu0
    %1795 = vmatprep.subr.mxu0 %v541
    %1796 = vmatpush1.msra.mxu0 %v540
    %1797 = vmatprep.subr.mxu0 %v545
    %1798 = vmatpush1.msra.mxu0 %v544
    %1799 = vmatprep.subr.mxu0 %v549
    %1800 = vmatpush1.msra.mxu0 %v548
    %1801 = vmatprep.subr.mxu0 %v553
    %1802 = vmatpush1.msra.mxu0 %v552
    %1803 = vmatprep.subr.mxu0 %v557
    %1804 = vmatpush1.msra.mxu0 %v556
    %1805 = vmatprep.subr.mxu0 %v561
    %1806 = vmatpush1.msra.mxu0 %v560
    %1807 = vmatprep.subr.mxu0 %v565
    %1808 = vmatpush1.msra.mxu0 %v564
    %1809 = vmatprep.subr.mxu0 %v569
    %1810 = vmatpush1.msra.mxu0 %v568
    %1811 = vmatprep.subr.mxu0 %v573
    %1812 = vmatpush1.msra.mxu0 %v572
    %1813 = vmatprep.subr.mxu0 %v577
    %1814 = vmatpush1.msra.mxu0 %v576
    %1815 = vmatprep.subr.mxu0 %v581
    %1816 = vmatpush1.msra.mxu0 %v580
    %1817 = vmatprep.subr.mxu0 %v585
    %1818 = vmatpush1.msra.mxu0 %v584
    %1819 = vmatprep.subr.mxu0 %v589
    %1820 = vmatpush1.msra.mxu0 %v588
    %1821 = vmatprep.subr.mxu0 %v593
    %1822 = vmatpush1.msra.mxu0 %v592
    %1823 = vmatprep.subr.mxu0 %v597
    %1824 = vmatpush1.msra.mxu0 %v596
    %1825 = vmatprep.subr.mxu0 %v601
    %1826 = vmatpush1.msra.mxu0 %v600
    %1827 = vmatprep.subr.mxu0 0.0
    %1828 = vmatpush1.msra.mxu0 0.0
    %1829 = vmatprep.subr.mxu0 0.0
    %1830 = vmatpush1.msra.mxu0 0.0
    %1831 = vmatprep.subr.mxu0 0.0
    %1832 = vmatpush1.msra.mxu0 0.0
    %1833 = vmatprep.subr.mxu0 0.0
    %1834 = vmatpush1.msra.mxu0 0.0
    %1835 = vmatprep.subr.mxu0 0.0
    %1836 = vmatpush1.msra.mxu0 0.0
    %1837 = vmatprep.subr.mxu0 0.0
    %1838 = vmatpush1.msra.mxu0 0.0
    %1839 = vmatprep.subr.mxu0 0.0
    %1840 = vmatpush1.msra.mxu0 0.0
    %1841 = vmatprep.subr.mxu0 0.0
    %1842 = vmatpush1.msra.mxu0 0.0
    %1843 = vmatprep.subr.mxu0 0.0
    %1844 = vmatpush1.msra.mxu0 0.0
    %1845 = vmatprep.subr.mxu0 0.0
    %1846 = vmatpush1.msra.mxu0 0.0
    %1847 = vmatprep.subr.mxu0 0.0
    %1848 = vmatpush1.msra.mxu0 0.0
    %1849 = vmatprep.subr.mxu0 0.0
    %1850 = vmatpush1.msra.mxu0 0.0
    %1851 = vmatprep.subr.mxu0 0.0
    %1852 = vmatpush1.msra.mxu0 0.0
    %1853 = vmatprep.subr.mxu0 0.0
    %1854 = vmatpush1.msra.mxu0 0.0
    %1855 = vmatprep.subr.mxu0 0.0
    %1856 = vmatpush1.msra.mxu0 0.0
    %1857 = vmatprep.subr.mxu0 0.0
    %1858 = vmatpush1.msra.mxu0 0.0
    %1859 = vmatprep.mubr.f32.mxu0 0.0
    %1860 = vmatmul.mubr.f32.gmra.mrb[0].mxu0 %v1721
    %v1861 = vpop.f32.mrb[0].mxu0
    %v1862 = vadd.f32 0.0, %v1861
    %v1863 = vpop.f32.mrb[0].mxu0
    %v1864 = vadd.f32 0.0, %v1863
    %1865 = vdwg.mxu0
    %v1870 = vcombine.low %v1791, %v1793
    %v1871 = vcombine.low %v1862, %v1864
    %v1873 = vunpack.c.l.s4 1983009808
    %v1874 = vunpack.c.0.s8 %v1873
    %v1875 = vlaneseq
    %v1876 = vshrl.u32 %v1875, 7
    %v1877 = vsub.s32 %v1874, %v1876
    %v1878 = vrot.slane %v1870, %v1877
    %v1880 = vunpack.c.l.s4 1983009808
    %v1881 = vunpack.c.0.s8 %v1880
    %v1882 = vlaneseq
    %v1883 = vshrl.u32 %v1882, 7
    %v1884 = vsub.s32 %v1881, %v1883
    %v1885 = vrot.slane %v1871, %v1884
    %v1886 = vcombine.low %v1878, %v1885
    %v1888 = vadd.f32 %v1723, %v1886
    %v1889 = vxor.u32 %v1888, 2147483648
    %v1890 = vmul.f32 %v1889, 1.442695
    %v1891 = vpow.pop %v1890
    %v1892 = vadd.f32 %v1891, 1.0
    %v1893 = vrcp.pop %v1892
    %v1894 = vmul.f32 1.0, %v1893
    %v1896 = vrot.slane %v1888, 6
    %v1898 = vtanh.pop %v1896
    %v1900 = vrot.slane %v1894, 2
    %v1902 = vmul.f32 %v1900, %v1717
    %v1903 = vmul.f32 %v1894, %v1898
    %v1904 = vadd.f32 %v1902, %v1903
    %v1905 = vtanh.pop %v1904
    %v1906 = vrot.slane %v1894, 4
    %v1908 = vmul.f32 %v1906, %v1905
    %s1909 = scalar_lea.vmem [#allocation2], 56
    %v1910 = vld [vmem:[%s1909] sm:$0xff]
    %1911 = vmatprep.subr.mxu0 %v539
    %1912 = vmatpush1.msra.mxu0 %v538
    %1913 = vmatprep.subr.mxu0 %v543
    %1914 = vmatpush1.msra.mxu0 %v542
    %1915 = vmatprep.subr.mxu0 %v547
    %1916 = vmatpush1.msra.mxu0 %v546
    %1917 = vmatprep.subr.mxu0 %v551
    %1918 = vmatpush1.msra.mxu0 %v550
    %1919 = vmatprep.subr.mxu0 %v555
    %1920 = vmatpush1.msra.mxu0 %v554
    %1921 = vmatprep.subr.mxu0 %v559
    %1922 = vmatpush1.msra.mxu0 %v558
    %1923 = vmatprep.subr.mxu0 %v563
    %1924 = vmatpush1.msra.mxu0 %v562
    %1925 = vmatprep.subr.mxu0 %v567
    %1926 = vmatpush1.msra.mxu0 %v566
    %1927 = vmatprep.subr.mxu0 %v571
    %1928 = vmatpush1.msra.mxu0 %v570
    %1929 = vmatprep.subr.mxu0 %v575
    %1930 = vmatpush1.msra.mxu0 %v574
    %1931 = vmatprep.subr.mxu0 %v579
    %1932 = vmatpush1.msra.mxu0 %v578
    %1933 = vmatprep.subr.mxu0 %v583
    %1934 = vmatpush1.msra.mxu0 %v582
    %1935 = vmatprep.subr.mxu0 %v587
    %1936 = vmatpush1.msra.mxu0 %v586
    %1937 = vmatprep.subr.mxu0 %v591
    %1938 = vmatpush1.msra.mxu0 %v590
    %1939 = vmatprep.subr.mxu0 %v595
    %1940 = vmatpush1.msra.mxu0 %v594
    %1941 = vmatprep.subr.mxu0 %v599
    %1942 = vmatpush1.msra.mxu0 %v598
    %1943 = vmatprep.subr.mxu0 0.0
    %1944 = vmatpush1.msra.mxu0 0.0
    %1945 = vmatprep.subr.mxu0 0.0
    %1946 = vmatpush1.msra.mxu0 0.0
    %1947 = vmatprep.subr.mxu0 0.0
    %1948 = vmatpush1.msra.mxu0 0.0
    %1949 = vmatprep.subr.mxu0 0.0
    %1950 = vmatpush1.msra.mxu0 0.0
    %1951 = vmatprep.subr.mxu0 0.0
    %1952 = vmatpush1.msra.mxu0 0.0
    %1953 = vmatprep.subr.mxu0 0.0
    %1954 = vmatpush1.msra.mxu0 0.0
    %1955 = vmatprep.subr.mxu0 0.0
    %1956 = vmatpush1.msra.mxu0 0.0
    %1957 = vmatprep.subr.mxu0 0.0
    %1958 = vmatpush1.msra.mxu0 0.0
    %1959 = vmatprep.subr.mxu0 0.0
    %1960 = vmatpush1.msra.mxu0 0.0
    %1961 = vmatprep.subr.mxu0 0.0
    %1962 = vmatpush1.msra.mxu0 0.0
    %1963 = vmatprep.subr.mxu0 0.0
    %1964 = vmatpush1.msra.mxu0 0.0
    %1965 = vmatprep.subr.mxu0 0.0
    %1966 = vmatpush1.msra.mxu0 0.0
    %1967 = vmatprep.subr.mxu0 0.0
    %1968 = vmatpush1.msra.mxu0 0.0
    %1969 = vmatprep.subr.mxu0 0.0
    %1970 = vmatpush1.msra.mxu0 0.0
    %1971 = vmatprep.subr.mxu0 0.0
    %1972 = vmatpush1.msra.mxu0 0.0
    %1973 = vmatprep.subr.mxu0 0.0
    %1974 = vmatpush1.msra.mxu0 0.0
    %1975 = vmatprep.mubr.f32.mxu0 0.0
    %1976 = vmatmul.mubr.f32.gmra.mrb[0].mxu0 %v1908
    %v1977 = vpop.f32.mrb[0].mxu0
    %v1978 = vadd.f32 0.0, %v1977
    %v1979 = vpop.f32.mrb[0].mxu0
    %v1980 = vadd.f32 0.0, %v1979
    %1981 = vdwg.mxu0
    %1982 = vmatprep.subr.mxu0 %v541
    %1983 = vmatpush1.msra.mxu0 %v540
    %1984 = vmatprep.subr.mxu0 %v545
    %1985 = vmatpush1.msra.mxu0 %v544
    %1986 = vmatprep.subr.mxu0 %v549
    %1987 = vmatpush1.msra.mxu0 %v548
    %1988 = vmatprep.subr.mxu0 %v553
    %1989 = vmatpush1.msra.mxu0 %v552
    %1990 = vmatprep.subr.mxu0 %v557
    %1991 = vmatpush1.msra.mxu0 %v556
    %1992 = vmatprep.subr.mxu0 %v561
    %1993 = vmatpush1.msra.mxu0 %v560
    %1994 = vmatprep.subr.mxu0 %v565
    %1995 = vmatpush1.msra.mxu0 %v564
    %1996 = vmatprep.subr.mxu0 %v569
    %1997 = vmatpush1.msra.mxu0 %v568
    %1998 = vmatprep.subr.mxu0 %v573
    %1999 = vmatpush1.msra.mxu0 %v572
    %2000 = vmatprep.subr.mxu0 %v577
    %2001 = vmatpush1.msra.mxu0 %v576
    %2002 = vmatprep.subr.mxu0 %v581
    %2003 = vmatpush1.msra.mxu0 %v580
    %2004 = vmatprep.subr.mxu0 %v585
    %2005 = vmatpush1.msra.mxu0 %v584
    %2006 = vmatprep.subr.mxu0 %v589
    %2007 = vmatpush1.msra.mxu0 %v588
    %2008 = vmatprep.subr.mxu0 %v593
    %2009 = vmatpush1.msra.mxu0 %v592
    %2010 = vmatprep.subr.mxu0 %v597
    %2011 = vmatpush1.msra.mxu0 %v596
    %2012 = vmatprep.subr.mxu0 %v601
    %2013 = vmatpush1.msra.mxu0 %v600
    %2014 = vmatprep.subr.mxu0 0.0
    %2015 = vmatpush1.msra.mxu0 0.0
    %2016 = vmatprep.subr.mxu0 0.0
    %2017 = vmatpush1.msra.mxu0 0.0
    %2018 = vmatprep.subr.mxu0 0.0
    %2019 = vmatpush1.msra.mxu0 0.0
    %2020 = vmatprep.subr.mxu0 0.0
    %2021 = vmatpush1.msra.mxu0 0.0
    %2022 = vmatprep.subr.mxu0 0.0
    %2023 = vmatpush1.msra.mxu0 0.0
    %2024 = vmatprep.subr.mxu0 0.0
    %2025 = vmatpush1.msra.mxu0 0.0
    %2026 = vmatprep.subr.mxu0 0.0
    %2027 = vmatpush1.msra.mxu0 0.0
    %2028 = vmatprep.subr.mxu0 0.0
    %2029 = vmatpush1.msra.mxu0 0.0
    %2030 = vmatprep.subr.mxu0 0.0
    %2031 = vmatpush1.msra.mxu0 0.0
    %2032 = vmatprep.subr.mxu0 0.0
    %2033 = vmatpush1.msra.mxu0 0.0
    %2034 = vmatprep.subr.mxu0 0.0
    %2035 = vmatpush1.msra.mxu0 0.0
    %2036 = vmatprep.subr.mxu0 0.0
    %2037 = vmatpush1.msra.mxu0 0.0
    %2038 = vmatprep.subr.mxu0 0.0
    %2039 = vmatpush1.msra.mxu0 0.0
    %2040 = vmatprep.subr.mxu0 0.0
    %2041 = vmatpush1.msra.mxu0 0.0
    %2042 = vmatprep.subr.mxu0 0.0
    %2043 = vmatpush1.msra.mxu0 0.0
    %2044 = vmatprep.subr.mxu0 0.0
    %2045 = vmatpush1.msra.mxu0 0.0
    %2046 = vmatprep.mubr.f32.mxu0 0.0
    %2047 = vmatmul.mubr.f32.gmra.mrb[0].mxu0 %v1908
    %v2048 = vpop.f32.mrb[0].mxu0
    %v2049 = vadd.f32 0.0, %v2048
    %v2050 = vpop.f32.mrb[0].mxu0
    %v2051 = vadd.f32 0.0, %v2050
    %2052 = vdwg.mxu0
    %v2057 = vcombine.low %v1978, %v1980
    %v2058 = vcombine.low %v2049, %v2051
    %v2060 = vunpack.c.l.s4 1983009808
    %v2061 = vunpack.c.0.s8 %v2060
    %v2062 = vlaneseq
    %v2063 = vshrl.u32 %v2062, 7
    %v2064 = vsub.s32 %v2061, %v2063
    %v2065 = vrot.slane %v2057, %v2064
    %v2067 = vunpack.c.l.s4 1983009808
    %v2068 = vunpack.c.0.s8 %v2067
    %v2069 = vlaneseq
    %v2070 = vshrl.u32 %v2069, 7
    %v2071 = vsub.s32 %v2068, %v2070
    %v2072 = vrot.slane %v2058, %v2071
    %v2073 = vcombine.low %v2065, %v2072
    %v2075 = vadd.f32 %v1910, %v2073
    %v2076 = vxor.u32 %v2075, 2147483648
    %v2077 = vmul.f32 %v2076, 1.442695
    %v2078 = vpow.pop %v2077
    %v2079 = vadd.f32 %v2078, 1.0
    %v2080 = vrcp.pop %v2079
    %v2081 = vmul.f32 1.0, %v2080
    %v2083 = vrot.slane %v2075, 6
    %v2085 = vtanh.pop %v2083
    %v2087 = vrot.slane %v2081, 2
    %v2089 = vmul.f32 %v2087, %v1904
    %v2090 = vmul.f32 %v2081, %v2085
    %v2091 = vadd.f32 %v2089, %v2090
    %v2092 = vtanh.pop %v2091
    %v2093 = vrot.slane %v2081, 4
    %v2095 = vmul.f32 %v2093, %v2092
    %2096 = vst [vmem:[#allocation3] sm:$0x3] %v2095
    // Predicated region
    $region18: #{_lambda_.1} parent=1 // pred_check
      _
    $region19: #{_lambda_.1} parent=1 // pred_check_branch
      %2098 = sbr.rel (0) target = $region21
    $region20: #{_lambda_.1} parent=1 // pred_region
      %s2100 = ssub.s32 32, 32
      %2101 = vsyncadd [#allocation4], %s2100
      %s2103 = sshll.u32 [#allocation3], 4
      %s2104 = int_to_ptr.vmem [resolvable:$true] %s2103
      %2106 = dma.vmem_to_hbm [thread:$0]  %s2104, 32, %s4, [#allocation4]
    $region21: #{_lambda_.1} parent=1 // pred_fallthru
      _
    // Predicated region
    $region22: #{_lambda_.1} parent=1 // pred_check
      _
    $region23: #{_lambda_.1} parent=1 // pred_check_branch
      %2108 = sbr.rel (0) target = $region25
    $region24: #{_lambda_.1} parent=1 // pred_region
      %2109 = dma.done [#allocation4], 32
    $region25: #{_lambda_.1} parent=1 // pred_fallthru
      _
    %2110 = vsyncpa [#allocation4], 1

</llo_original>
